<compile_context>
chip_gen: v6e
topology: v6e:2x2x1
jax: 0.10.0
libtpu: 0.0.40
codegen_flags: <defaults>
</compile_context>

<pallas_src>
import functools

import jax
import jax.numpy as jnp
from jax.experimental import pallas as pl
from jax.experimental.pallas import tpu as pltpu

EPS = 1e-5
_LANE = 128
_MAX_TILE_LANES = 8192          # cap on flattened lanes per compute tile


def _round_up(x, m):
    return (x + m - 1) // m * m


def _divisors_desc(n):
    return [d for d in range(n, 0, -1) if n % d == 0]


def _vmem_capacity_bytes():
    try:
        return int(pltpu.get_tpu_info().vmem_capacity_bytes)
    except Exception:
        return 64 << 20          # conservative fallback (v7x physical VMEM)


def _footprint_bytes(c_in, cb, k2, lh, thw, thw_pad, nt, out_bufs):
    inp = 2 * c_in * lh * 2                        # double-buffered bf16 halo tile
    wgt = 2 * k2 * cb * c_in * 2                   # double-buffered tap weights
    mk = 2 * thw * 4                               # valid-column mask
    out = out_bufs * cb * nt * thw_pad * 4         # resident f32 output block(s)
    acc = cb * thw * 4                             # conv accumulator scratch
    tmp = 2 * c_in * thw * 2 + 2 * cb * thw * 4    # shifted rhs + epilogue temps
    stats = 2 * cb * 4 * _LANE                     # padded per-channel stats
    return inp + wgt + mk + out + acc + tmp + stats


def _choose_config(c_in, c_out, k, wp, hout, budget):
    """Pick (C_out split, rows-per-tile, output buffer count) to fit `budget`."""
    k2 = k * k
    th_cands = [d for d in _divisors_desc(hout) if d * wp <= _MAX_TILE_LANES] or [1]
    nc_cands = [d for d in sorted(_divisors_desc(c_out))
                if d == 1 or (c_out // d) % 8 == 0]
    fallback = None
    for nc in nc_cands:                 # prefer no C_out split (input reuse)
        cb = c_out // nc
        for out_bufs in (2, 1):         # prefer overlapped output writeback
            for th in th_cands:         # prefer big tiles (fewer grid steps)
                thw = th * wp
                thw_pad = _round_up(thw, _LANE)
                nt = hout // th
                lh = (th + k - 1) * wp + (k - 1)
                fp = _footprint_bytes(c_in, cb, k2, lh, thw, thw_pad, nt, out_bufs)
                if fp <= budget:
                    return nc, th, out_bufs, fp
                if fallback is None or fp < fallback[3]:
                    fallback = (nc, th, out_bufs, fp)
    return fallback


def _convblock_kernel(x_ref, w_ref, m_ref, o_ref, sum_ref, ssq_ref, acc_ref,
                      *, k, wp, thw, thw_pad, inv_hw):
    # x_ref:   (1, 1, C_in, LH)    bf16  halo'd, row-flattened input tile
    # w_ref:   (k*k, CB, C_in)     bf16  per-tap weight slabs
    # m_ref:   (1, THW)            f32   1.0 on valid output columns, else 0.0
    # o_ref:   (1, CB, NT*THWpad)  f32   resident output block (per image/C-tile)
    # sum_ref: (CB, 1)             f32   running masked per-channel sum
    # ssq_ref: (CB, 1)             f32   centered sum of squares (epilogue)
    # acc_ref: (CB, THW)           f32   conv accumulator for the current tile
    t = pl.program_id(2)
    nt = pl.num_programs(2)

    @pl.when(t == 0)
    def _init():
        sum_ref[...] = jnp.zeros_like(sum_ref)

    # KxK (stride 1) conv as K*K shifted MXU matmuls.  The input tile is
    # row-flattened, so tap (ki, kj) is the constant lane offset ki*Wp + kj.
    # bf16 x bf16 inputs, f32 accumulation.  Conv bias is omitted: InstanceNorm
    # (affine=False) cancels a per-channel bias exactly (would NOT hold if an
    # affine/bias-bearing norm variant were ever plumbed through).
    for idx in range(k * k):
        ki, kj = idx // k, idx % k
        off = ki * wp + kj
        rhs = x_ref[0, 0, :, pl.ds(off, thw)]                 # (C_in, THW) bf16
        contrib = jnp.dot(w_ref[idx], rhs, preferred_element_type=jnp.float32)
        if idx == 0:
            acc_ref[...] = contrib
        else:
            acc_ref[...] += contrib

    # Fused statistics sweep: masked per-channel sum (mask zeroes the (k-1)
    # junk columns that row-flattening introduces at each row end).
    y = acc_ref[...]
    msk = m_ref[...]
    sum_ref[...] += jnp.sum(y * msk, axis=1, keepdims=True)

    # Stage the tile into the VMEM-resident output block (128-aligned start,
    # masked tail; the block is only written back to HBM once per image).
    start = pl.multiple_of(t * thw_pad, _LANE)
    o_ref[0, :, pl.ds(start, thw)] = y

    # Last tile of this image / channel block: InstanceNorm + SiLU in place.
    @pl.when(t == nt - 1)
    def _finalize():
        mean = sum_ref[...] * inv_hw                          # (CB, 1)

        # Centered second pass for the variance (numerically safer than
        # E[y^2]-E[y]^2; cheap because y is already VMEM-resident), chunked
        # per slab to bound VMEM temporaries.
        ssq_ref[...] = jnp.zeros_like(ssq_ref)

        def _ssq_body(i, carry):
            ofs = pl.multiple_of(i * thw_pad, _LANE)
            d = (o_ref[0, :, pl.ds(ofs, thw)] - mean) * msk
            ssq_ref[...] += jnp.sum(d * d, axis=1, keepdims=True)
            return carry

        jax.lax.fori_loop(0, nt, _ssq_body, 0)
        scale = jax.lax.rsqrt(ssq_ref[...] * inv_hw + EPS)

        def _norm_body(i, carry):
            ofs = pl.multiple_of(i * thw_pad, _LANE)
            yv = o_ref[0, :, pl.ds(ofs, thw)]
            yh = (yv - mean) * scale
            o_ref[0, :, pl.ds(ofs, thw)] = yh * jax.nn.sigmoid(yh)   # SiLU
            return carry

        jax.lax.fori_loop(0, nt, _norm_body, 0)


@functools.partial(jax.jit, static_argnames=("kernel_size", "stride", "padding"))
def conv_block_forward(x, weight, bias=None, kernel_size=3, stride=1, padding=1):
    """ConvBlock forward: Conv2d(k, s=1, p) -> InstanceNorm2d(affine=False) -> SiLU.

    x: (N, C_in, H, W); weight: (C_out, C_in, K, K); bias: (C_out,) or None.
    `bias` is accepted for API parity but unused: InstanceNorm cancels it.
    """
    del bias
    if stride != 1:
        # TODO(synk): strided conv would need an im2col/strided-gather path.
        raise NotImplementedError("conv_block_forward: only stride=1 is implemented")

    n, c_in, h, w = x.shape
    c_out = weight.shape[0]
    k = kernel_size
    p = padding
    k2 = k * k

    hp, wp = h + 2 * p, w + 2 * p
    hout, wout = hp - k + 1, wp - k + 1
    inv_hw = 1.0 / float(hout * wout)

    cap = _vmem_capacity_bytes()
    budget = (cap * 3) // 4                  # leave headroom for compiler temps
    nc, th, out_bufs, fp = _choose_config(c_in, c_out, k, wp, hout, budget)
    cb = c_out // nc
    nt = hout // th
    thw = th * wp
    thw_pad = _round_up(thw, _LANE)
    lh = (th + k - 1) * wp + (k - 1)

    # ---- wrapper-side data prep (pure XLA, cheap) --------------------------
    xb = x.astype(jnp.bfloat16)              # bf16 feeds the MXU, halves HBM reads
    xpad = jnp.pad(xb, ((0, 0), (0, 0), (p, p), (p, p)))        # (N, Cin, Hp, Wp)
    xf = xpad.reshape(n, c_in, hp * wp)
    xf = jnp.pad(xf, ((0, 0), (0, 0), (0, k - 1)))              # tap tail slack
    if nt == 1:
        xh = xf[:, None, :, :lh]
    else:
        xh = jnp.stack([xf[:, :, t * thw:t * thw + lh] for t in range(nt)], axis=1)
    # xh: (N, NT, C_in, LH) row-tile halo windows -> only (TH+k-1)/TH extra HBM
    # traffic vs. the raw input (vs. ~9x for a materialized im2col).

    w_taps = weight.astype(jnp.bfloat16).transpose(2, 3, 0, 1).reshape(k2, c_out, c_in)

    col = jnp.arange(thw, dtype=jnp.int32) % wp
    mask = (col < wout).astype(jnp.float32).reshape(1, thw)

    out_kwargs = {}
    if out_bufs == 1:
        # Single-buffer the resident output block (written back only once per
        # (image, C-tile)); frees the largest VMEM consumer on v7x-sized budgets.
        out_kwargs["pipeline_mode"] = pl.Buffered(1)
    out_spec = pl.BlockSpec((1, cb, nt * thw_pad), lambda b, c, t: (b, c, 0),
                            **out_kwargs)

    vmem_limit = int(min(max(int(fp * 1.25) + (4 << 20), 16 << 20), cap - (2 << 20)))
    vmem_limit = int(max(vmem_limit, fp))    # never clamp below the requirement

    cost = pl.CostEstimate(
        flops=2 * n * k2 * c_out * c_in * hout * wp,
        transcendentals=n * c_out * hout * wp,
        bytes_accessed=(n * nt * c_in * lh * 2 + k2 * c_out * c_in * 2
                        + thw * 4 + n * c_out * nt * thw_pad * 4),
    )

    kern = functools.partial(_convblock_kernel, k=k, wp=wp, thw=thw,
                             thw_pad=thw_pad, inv_hw=inv_hw)

    out = pl.pallas_call(
        kern,
        out_shape=jax.ShapeDtypeStruct((n, c_out, nt * thw_pad), jnp.float32),
        grid_spec=pltpu.PrefetchScalarGridSpec(
            num_scalar_prefetch=0,
            grid=(n, nc, nt),
            in_specs=[
                pl.BlockSpec((1, 1, c_in, lh), lambda b, c, t: (b, t, 0, 0)),
                pl.BlockSpec((k2, cb, c_in), lambda b, c, t: (0, c, 0)),
                pl.BlockSpec((1, thw), lambda b, c, t: (0, 0)),
            ],
            out_specs=out_spec,
            scratch_shapes=[
                pltpu.VMEM((cb, 1), jnp.float32),     # per-channel masked sum
                pltpu.VMEM((cb, 1), jnp.float32),     # centered sum of squares
                pltpu.VMEM((cb, thw), jnp.float32),   # conv accumulator
            ],
        ),
        compiler_params=pltpu.CompilerParams(
            dimension_semantics=("parallel", "parallel", "arbitrary"),
            vmem_limit_bytes=vmem_limit,
        ),
        cost_estimate=cost,
    )(xh, w_taps, mask)

    # Strip the per-slab lane padding and the (k-1) junk columns per row.
    out = out.reshape(n, c_out, nt, thw_pad)[:, :, :, :thw]
    out = out.reshape(n, c_out, nt, th, wp)[:, :, :, :, :wout]
    return out.reshape(n, c_out, hout, wout)


def _reference(x, weight, bias):
    # Pure-JAX reference (conv + bias -> instance norm -> silu).  Inputs are
    # rounded to bf16 to match the kernel's MXU input precision; accumulation
    # is f32 on both sides.  Bias is kept here to demonstrate that dropping it
    # in the kernel is exact (InstanceNorm cancels it).
    xb = x.astype(jnp.bfloat16).astype(jnp.float32)
    wb = weight.astype(jnp.bfloat16).astype(jnp.float32)
    y = jax.lax.conv_general_dilated(
        xb, wb, window_strides=(1, 1), padding=((1, 1), (1, 1)),
        dimension_numbers=("NCHW", "OIHW", "NCHW"),
        precision=jax.lax.Precision.HIGHEST)
    y = y + bias.reshape(1, -1, 1, 1)
    mean = jnp.mean(y, axis=(2, 3), keepdims=True)
    var = jnp.mean((y - mean) ** 2, axis=(2, 3), keepdims=True)
    yhat = (y - mean) * jax.lax.rsqrt(var + EPS)
    return yhat * jax.nn.sigmoid(yhat)


if __name__ == "__main__":
    key = jax.random.PRNGKey(0)
    kx, kw, kb = jax.random.split(key, 3)

    N, C_IN, C_OUT, H, W = 2, 4, 8, 16, 16
    K = 3

    x = jax.random.normal(kx, (N, C_IN, H, W), dtype=jnp.float32)
    # Deterministic synthetic parameters (Conv2d weight/bias shapes).
    fan_in = C_IN * K * K
    bound = 1.0 / (fan_in ** 0.5)
    weight = jax.random.uniform(kw, (C_OUT, C_IN, K, K), jnp.float32, -bound, bound)
    bias = jax.random.uniform(kb, (C_OUT,), jnp.float32, -bound, bound)

    out = conv_block_forward(x, weight, bias)
    out = jax.block_until_ready(out)

    ref = _reference(x, weight, bias)
    assert out.shape == (N, C_OUT, H, W)
    assert jnp.allclose(out, ref, atol=2e-3, rtol=2e-3), "mismatch vs reference"

    print("KERNEL_OK")
</pallas_src>

<mosaic_0001>
module attributes {stable_mosaic.version = 11 : i64} {
  func.func @_convblock_kernel(%arg0: i32, %arg1: i32, %arg2: i32, %arg3: memref<1x1x4x326xbf16, #tpu.memory_space<vmem>>, %arg4: memref<9x8x4xbf16, #tpu.memory_space<vmem>>, %arg5: memref<1x288xf32, #tpu.memory_space<vmem>>, %arg6: memref<1x8x384xf32, #tpu.memory_space<vmem>>, %arg7: memref<8x1xf32, #tpu.memory_space<vmem>>, %arg8: memref<8x1xf32, #tpu.memory_space<vmem>>, %arg9: memref<8x288xf32, #tpu.memory_space<vmem>>) attributes {dimension_semantics = [#tpu.dimension_semantics<parallel>, #tpu.dimension_semantics<parallel>, #tpu.dimension_semantics<arbitrary>], iteration_bounds = array<i64: 2, 1, 1>, scalar_prefetch = 0 : i64, scratch_operands = 3 : i64, tpu.core_type = #tpu.core_type<tc>, window_params = [{transform_indices = @transform_0, window_bounds = array<i64: 1, 1, 4, 326>}, {transform_indices = @transform_1, window_bounds = array<i64: 9, 8, 4>}, {pipeline_mode = #tpu.pipeline_mode<synchronous>, transform_indices = @transform_2, window_bounds = array<i64: 1, 288>}, {transform_indices = @transform_3, window_bounds = array<i64: 1, 8, 384>}]} {
    %c0_i32 = arith.constant 0 : i32
    %0 = arith.cmpi eq, %arg2, %c0_i32 : i32
    %1 = arith.extui %0 : i1 to i32
    %c0_i32_0 = arith.constant 0 : i32
    %2 = arith.cmpi ne, %1, %c0_i32_0 : i32
    scf.if %2 {
      %cst_104 = arith.constant 0.000000e+00 : f32
      %91 = vector.broadcast %cst_104 : f32 to vector<8x1xf32>
      %c0_105 = arith.constant 0 : index
      %c0_106 = arith.constant 0 : index
      %92 = vector.load %arg7[%c0_105, %c0_106] : memref<8x1xf32, #tpu.memory_space<vmem>>, vector<8x1xf32>
      tpu.vector_store %arg7[%c0_105, %c0_106], %91 {strides = array<i32>} : memref<8x1xf32, #tpu.memory_space<vmem>>, vector<8x1xf32>,
    } else {
    }
    %c0 = arith.constant 0 : index
    %c0_1 = arith.constant 0 : index
    %c0_2 = arith.constant 0 : index
    %c0_3 = arith.constant 0 : index
    %3 = vector.load %arg3[%c0, %c0_1, %c0_2, %c0_3] : memref<1x1x4x326xbf16, #tpu.memory_space<vmem>>, vector<1x1x4x288xbf16>
    %4 = vector.shape_cast %3 : vector<1x1x4x288xbf16> to vector<4x288xbf16>
    %c0_4 = arith.constant 0 : index
    %c0_5 = arith.constant 0 : index
    %c0_6 = arith.constant 0 : index
    %5 = vector.load %arg4[%c0_4, %c0_5, %c0_6] : memref<9x8x4xbf16, #tpu.memory_space<vmem>>, vector<1x8x4xbf16>
    %6 = vector.shape_cast %5 : vector<1x8x4xbf16> to vector<8x4xbf16>
    %cst = arith.constant dense<0.000000e+00> : vector<8x288xf32>
    %7 = tpu.matmul %6, %4, %cst {dimension_numbers = #tpu.dot_dimension_numbers<[1], [0], [0], [1], [0, 0, 1, 1], [], []>} : vector<8x4xbf16>, vector<4x288xbf16>, vector<8x288xf32> -> vector<8x288xf32>
    %c0_7 = arith.constant 0 : index
    %c0_8 = arith.constant 0 : index
    %8 = vector.load %arg9[%c0_7, %c0_8] : memref<8x288xf32, #tpu.memory_space<vmem>>, vector<8x288xf32>
    tpu.vector_store %arg9[%c0_7, %c0_8], %7 {strides = array<i32>} : memref<8x288xf32, #tpu.memory_space<vmem>>, vector<8x288xf32>,
    %c0_9 = arith.constant 0 : index
    %c0_10 = arith.constant 0 : index
    %c0_11 = arith.constant 0 : index
    %c1 = arith.constant 1 : index
    %9 = vector.load %arg3[%c0_9, %c0_10, %c0_11, %c1] : memref<1x1x4x326xbf16, #tpu.memory_space<vmem>>, vector<1x1x4x288xbf16>
    %10 = vector.shape_cast %9 : vector<1x1x4x288xbf16> to vector<4x288xbf16>
    %c1_12 = arith.constant 1 : index
    %c0_13 = arith.constant 0 : index
    %c0_14 = arith.constant 0 : index
    %11 = vector.load %arg4[%c1_12, %c0_13, %c0_14] : memref<9x8x4xbf16, #tpu.memory_space<vmem>>, vector<1x8x4xbf16>
    %12 = vector.shape_cast %11 : vector<1x8x4xbf16> to vector<8x4xbf16>
    %cst_15 = arith.constant dense<0.000000e+00> : vector<8x288xf32>
    %13 = tpu.matmul %12, %10, %cst_15 {dimension_numbers = #tpu.dot_dimension_numbers<[1], [0], [0], [1], [0, 0, 1, 1], [], []>} : vector<8x4xbf16>, vector<4x288xbf16>, vector<8x288xf32> -> vector<8x288xf32>
    %c0_16 = arith.constant 0 : index
    %c0_17 = arith.constant 0 : index
    %14 = vector.load %arg9[%c0_16, %c0_17] : memref<8x288xf32, #tpu.memory_space<vmem>>, vector<8x288xf32>
    %15 = arith.addf %14, %13 : vector<8x288xf32>
    %c0_18 = arith.constant 0 : index
    %c0_19 = arith.constant 0 : index
    %16 = vector.load %arg9[%c0_18, %c0_19] : memref<8x288xf32, #tpu.memory_space<vmem>>, vector<8x288xf32>
    tpu.vector_store %arg9[%c0_18, %c0_19], %15 {strides = array<i32>} : memref<8x288xf32, #tpu.memory_space<vmem>>, vector<8x288xf32>,
    %c0_20 = arith.constant 0 : index
    %c0_21 = arith.constant 0 : index
    %c0_22 = arith.constant 0 : index
    %c2 = arith.constant 2 : index
    %17 = vector.load %arg3[%c0_20, %c0_21, %c0_22, %c2] : memref<1x1x4x326xbf16, #tpu.memory_space<vmem>>, vector<1x1x4x288xbf16>
    %18 = vector.shape_cast %17 : vector<1x1x4x288xbf16> to vector<4x288xbf16>
    %c2_23 = arith.constant 2 : index
    %c0_24 = arith.constant 0 : index
    %c0_25 = arith.constant 0 : index
    %19 = vector.load %arg4[%c2_23, %c0_24, %c0_25] : memref<9x8x4xbf16, #tpu.memory_space<vmem>>, vector<1x8x4xbf16>
    %20 = vector.shape_cast %19 : vector<1x8x4xbf16> to vector<8x4xbf16>
    %cst_26 = arith.constant dense<0.000000e+00> : vector<8x288xf32>
    %21 = tpu.matmul %20, %18, %cst_26 {dimension_numbers = #tpu.dot_dimension_numbers<[1], [0], [0], [1], [0, 0, 1, 1], [], []>} : vector<8x4xbf16>, vector<4x288xbf16>, vector<8x288xf32> -> vector<8x288xf32>
    %c0_27 = arith.constant 0 : index
    %c0_28 = arith.constant 0 : index
    %22 = vector.load %arg9[%c0_27, %c0_28] : memref<8x288xf32, #tpu.memory_space<vmem>>, vector<8x288xf32>
    %23 = arith.addf %22, %21 : vector<8x288xf32>
    %c0_29 = arith.constant 0 : index
    %c0_30 = arith.constant 0 : index
    %24 = vector.load %arg9[%c0_29, %c0_30] : memref<8x288xf32, #tpu.memory_space<vmem>>, vector<8x288xf32>
    tpu.vector_store %arg9[%c0_29, %c0_30], %23 {strides = array<i32>} : memref<8x288xf32, #tpu.memory_space<vmem>>, vector<8x288xf32>,
    %c0_31 = arith.constant 0 : index
    %c0_32 = arith.constant 0 : index
    %c0_33 = arith.constant 0 : index
    %c18 = arith.constant 18 : index
    %25 = vector.load %arg3[%c0_31, %c0_32, %c0_33, %c18] : memref<1x1x4x326xbf16, #tpu.memory_space<vmem>>, vector<1x1x4x288xbf16>
    %26 = vector.shape_cast %25 : vector<1x1x4x288xbf16> to vector<4x288xbf16>
    %c3 = arith.constant 3 : index
    %c0_34 = arith.constant 0 : index
    %c0_35 = arith.constant 0 : index
    %27 = vector.load %arg4[%c3, %c0_34, %c0_35] : memref<9x8x4xbf16, #tpu.memory_space<vmem>>, vector<1x8x4xbf16>
    %28 = vector.shape_cast %27 : vector<1x8x4xbf16> to vector<8x4xbf16>
    %cst_36 = arith.constant dense<0.000000e+00> : vector<8x288xf32>
    %29 = tpu.matmul %28, %26, %cst_36 {dimension_numbers = #tpu.dot_dimension_numbers<[1], [0], [0], [1], [0, 0, 1, 1], [], []>} : vector<8x4xbf16>, vector<4x288xbf16>, vector<8x288xf32> -> vector<8x288xf32>
    %c0_37 = arith.constant 0 : index
    %c0_38 = arith.constant 0 : index
    %30 = vector.load %arg9[%c0_37, %c0_38] : memref<8x288xf32, #tpu.memory_space<vmem>>, vector<8x288xf32>
    %31 = arith.addf %30, %29 : vector<8x288xf32>
    %c0_39 = arith.constant 0 : index
    %c0_40 = arith.constant 0 : index
    %32 = vector.load %arg9[%c0_39, %c0_40] : memref<8x288xf32, #tpu.memory_space<vmem>>, vector<8x288xf32>
    tpu.vector_store %arg9[%c0_39, %c0_40], %31 {strides = array<i32>} : memref<8x288xf32, #tpu.memory_space<vmem>>, vector<8x288xf32>,
    %c0_41 = arith.constant 0 : index
    %c0_42 = arith.constant 0 : index
    %c0_43 = arith.constant 0 : index
    %c19 = arith.constant 19 : index
    %33 = vector.load %arg3[%c0_41, %c0_42, %c0_43, %c19] : memref<1x1x4x326xbf16, #tpu.memory_space<vmem>>, vector<1x1x4x288xbf16>
    %34 = vector.shape_cast %33 : vector<1x1x4x288xbf16> to vector<4x288xbf16>
    %c4 = arith.constant 4 : index
    %c0_44 = arith.constant 0 : index
    %c0_45 = arith.constant 0 : index
    %35 = vector.load %arg4[%c4, %c0_44, %c0_45] : memref<9x8x4xbf16, #tpu.memory_space<vmem>>, vector<1x8x4xbf16>
    %36 = vector.shape_cast %35 : vector<1x8x4xbf16> to vector<8x4xbf16>
    %cst_46 = arith.constant dense<0.000000e+00> : vector<8x288xf32>
    %37 = tpu.matmul %36, %34, %cst_46 {dimension_numbers = #tpu.dot_dimension_numbers<[1], [0], [0], [1], [0, 0, 1, 1], [], []>} : vector<8x4xbf16>, vector<4x288xbf16>, vector<8x288xf32> -> vector<8x288xf32>
    %c0_47 = arith.constant 0 : index
    %c0_48 = arith.constant 0 : index
    %38 = vector.load %arg9[%c0_47, %c0_48] : memref<8x288xf32, #tpu.memory_space<vmem>>, vector<8x288xf32>
    %39 = arith.addf %38, %37 : vector<8x288xf32>
    %c0_49 = arith.constant 0 : index
    %c0_50 = arith.constant 0 : index
    %40 = vector.load %arg9[%c0_49, %c0_50] : memref<8x288xf32, #tpu.memory_space<vmem>>, vector<8x288xf32>
    tpu.vector_store %arg9[%c0_49, %c0_50], %39 {strides = array<i32>} : memref<8x288xf32, #tpu.memory_space<vmem>>, vector<8x288xf32>,
    %c0_51 = arith.constant 0 : index
    %c0_52 = arith.constant 0 : index
    %c0_53 = arith.constant 0 : index
    %c20 = arith.constant 20 : index
    %41 = vector.load %arg3[%c0_51, %c0_52, %c0_53, %c20] : memref<1x1x4x326xbf16, #tpu.memory_space<vmem>>, vector<1x1x4x288xbf16>
    %42 = vector.shape_cast %41 : vector<1x1x4x288xbf16> to vector<4x288xbf16>
    %c5 = arith.constant 5 : index
    %c0_54 = arith.constant 0 : index
    %c0_55 = arith.constant 0 : index
    %43 = vector.load %arg4[%c5, %c0_54, %c0_55] : memref<9x8x4xbf16, #tpu.memory_space<vmem>>, vector<1x8x4xbf16>
    %44 = vector.shape_cast %43 : vector<1x8x4xbf16> to vector<8x4xbf16>
    %cst_56 = arith.constant dense<0.000000e+00> : vector<8x288xf32>
    %45 = tpu.matmul %44, %42, %cst_56 {dimension_numbers = #tpu.dot_dimension_numbers<[1], [0], [0], [1], [0, 0, 1, 1], [], []>} : vector<8x4xbf16>, vector<4x288xbf16>, vector<8x288xf32> -> vector<8x288xf32>
    %c0_57 = arith.constant 0 : index
    %c0_58 = arith.constant 0 : index
    %46 = vector.load %arg9[%c0_57, %c0_58] : memref<8x288xf32, #tpu.memory_space<vmem>>, vector<8x288xf32>
    %47 = arith.addf %46, %45 : vector<8x288xf32>
    %c0_59 = arith.constant 0 : index
    %c0_60 = arith.constant 0 : index
    %48 = vector.load %arg9[%c0_59, %c0_60] : memref<8x288xf32, #tpu.memory_space<vmem>>, vector<8x288xf32>
    tpu.vector_store %arg9[%c0_59, %c0_60], %47 {strides = array<i32>} : memref<8x288xf32, #tpu.memory_space<vmem>>, vector<8x288xf32>,
    %c0_61 = arith.constant 0 : index
    %c0_62 = arith.constant 0 : index
    %c0_63 = arith.constant 0 : index
    %c36 = arith.constant 36 : index
    %49 = vector.load %arg3[%c0_61, %c0_62, %c0_63, %c36] : memref<1x1x4x326xbf16, #tpu.memory_space<vmem>>, vector<1x1x4x288xbf16>
    %50 = vector.shape_cast %49 : vector<1x1x4x288xbf16> to vector<4x288xbf16>
    %c6 = arith.constant 6 : index
    %c0_64 = arith.constant 0 : index
    %c0_65 = arith.constant 0 : index
    %51 = vector.load %arg4[%c6, %c0_64, %c0_65] : memref<9x8x4xbf16, #tpu.memory_space<vmem>>, vector<1x8x4xbf16>
    %52 = vector.shape_cast %51 : vector<1x8x4xbf16> to vector<8x4xbf16>
    %cst_66 = arith.constant dense<0.000000e+00> : vector<8x288xf32>
    %53 = tpu.matmul %52, %50, %cst_66 {dimension_numbers = #tpu.dot_dimension_numbers<[1], [0], [0], [1], [0, 0, 1, 1], [], []>} : vector<8x4xbf16>, vector<4x288xbf16>, vector<8x288xf32> -> vector<8x288xf32>
    %c0_67 = arith.constant 0 : index
    %c0_68 = arith.constant 0 : index
    %54 = vector.load %arg9[%c0_67, %c0_68] : memref<8x288xf32, #tpu.memory_space<vmem>>, vector<8x288xf32>
    %55 = arith.addf %54, %53 : vector<8x288xf32>
    %c0_69 = arith.constant 0 : index
    %c0_70 = arith.constant 0 : index
    %56 = vector.load %arg9[%c0_69, %c0_70] : memref<8x288xf32, #tpu.memory_space<vmem>>, vector<8x288xf32>
    tpu.vector_store %arg9[%c0_69, %c0_70], %55 {strides = array<i32>} : memref<8x288xf32, #tpu.memory_space<vmem>>, vector<8x288xf32>,
    %c0_71 = arith.constant 0 : index
    %c0_72 = arith.constant 0 : index
    %c0_73 = arith.constant 0 : index
    %c37 = arith.constant 37 : index
    %57 = vector.load %arg3[%c0_71, %c0_72, %c0_73, %c37] : memref<1x1x4x326xbf16, #tpu.memory_space<vmem>>, vector<1x1x4x288xbf16>
    %58 = vector.shape_cast %57 : vector<1x1x4x288xbf16> to vector<4x288xbf16>
    %c7 = arith.constant 7 : index
    %c0_74 = arith.constant 0 : index
    %c0_75 = arith.constant 0 : index
    %59 = vector.load %arg4[%c7, %c0_74, %c0_75] : memref<9x8x4xbf16, #tpu.memory_space<vmem>>, vector<1x8x4xbf16>
    %60 = vector.shape_cast %59 : vector<1x8x4xbf16> to vector<8x4xbf16>
    %cst_76 = arith.constant dense<0.000000e+00> : vector<8x288xf32>
    %61 = tpu.matmul %60, %58, %cst_76 {dimension_numbers = #tpu.dot_dimension_numbers<[1], [0], [0], [1], [0, 0, 1, 1], [], []>} : vector<8x4xbf16>, vector<4x288xbf16>, vector<8x288xf32> -> vector<8x288xf32>
    %c0_77 = arith.constant 0 : index
    %c0_78 = arith.constant 0 : index
    %62 = vector.load %arg9[%c0_77, %c0_78] : memref<8x288xf32, #tpu.memory_space<vmem>>, vector<8x288xf32>
    %63 = arith.addf %62, %61 : vector<8x288xf32>
    %c0_79 = arith.constant 0 : index
    %c0_80 = arith.constant 0 : index
    %64 = vector.load %arg9[%c0_79, %c0_80] : memref<8x288xf32, #tpu.memory_space<vmem>>, vector<8x288xf32>
    tpu.vector_store %arg9[%c0_79, %c0_80], %63 {strides = array<i32>} : memref<8x288xf32, #tpu.memory_space<vmem>>, vector<8x288xf32>,
    %c0_81 = arith.constant 0 : index
    %c0_82 = arith.constant 0 : index
    %c0_83 = arith.constant 0 : index
    %c38 = arith.constant 38 : index
    %65 = vector.load %arg3[%c0_81, %c0_82, %c0_83, %c38] : memref<1x1x4x326xbf16, #tpu.memory_space<vmem>>, vector<1x1x4x288xbf16>
    %66 = vector.shape_cast %65 : vector<1x1x4x288xbf16> to vector<4x288xbf16>
    %c8 = arith.constant 8 : index
    %c0_84 = arith.constant 0 : index
    %c0_85 = arith.constant 0 : index
    %67 = vector.load %arg4[%c8, %c0_84, %c0_85] : memref<9x8x4xbf16, #tpu.memory_space<vmem>>, vector<1x8x4xbf16>
    %68 = vector.shape_cast %67 : vector<1x8x4xbf16> to vector<8x4xbf16>
    %cst_86 = arith.constant dense<0.000000e+00> : vector<8x288xf32>
    %69 = tpu.matmul %68, %66, %cst_86 {dimension_numbers = #tpu.dot_dimension_numbers<[1], [0], [0], [1], [0, 0, 1, 1], [], []>} : vector<8x4xbf16>, vector<4x288xbf16>, vector<8x288xf32> -> vector<8x288xf32>
    %c0_87 = arith.constant 0 : index
    %c0_88 = arith.constant 0 : index
    %70 = vector.load %arg9[%c0_87, %c0_88] : memref<8x288xf32, #tpu.memory_space<vmem>>, vector<8x288xf32>
    %71 = arith.addf %70, %69 : vector<8x288xf32>
    %c0_89 = arith.constant 0 : index
    %c0_90 = arith.constant 0 : index
    %72 = vector.load %arg9[%c0_89, %c0_90] : memref<8x288xf32, #tpu.memory_space<vmem>>, vector<8x288xf32>
    tpu.vector_store %arg9[%c0_89, %c0_90], %71 {strides = array<i32>} : memref<8x288xf32, #tpu.memory_space<vmem>>, vector<8x288xf32>,
    %c0_91 = arith.constant 0 : index
    %c0_92 = arith.constant 0 : index
    %73 = vector.load %arg9[%c0_91, %c0_92] : memref<8x288xf32, #tpu.memory_space<vmem>>, vector<8x288xf32>
    %c0_93 = arith.constant 0 : index
    %c0_94 = arith.constant 0 : index
    %74 = vector.load %arg5[%c0_93, %c0_94] : memref<1x288xf32, #tpu.memory_space<vmem>>, vector<1x288xf32>
    %c0_95 = arith.constant 0 : index
    %c0_96 = arith.constant 0 : index
    %75 = vector.load %arg7[%c0_95, %c0_96] : memref<8x1xf32, #tpu.memory_space<vmem>>, vector<8x1xf32>
    %76 = vector.broadcast %74 : vector<1x288xf32> to vector<8x288xf32>
    %77 = arith.mulf %73, %76 : vector<8x288xf32>
    %cst_97 = arith.constant dense<0.000000e+00> : vector<8xf32>
    %78 = vector.multi_reduction <add>, %77, %cst_97 [1] : vector<8x288xf32> to vector<8xf32>
    %79 = vector.shape_cast %78 : vector<8xf32> to vector<8x1xf32>
    %80 = arith.addf %75, %79 : vector<8x1xf32>
    %c0_98 = arith.constant 0 : index
    %c0_99 = arith.constant 0 : index
    %81 = vector.load %arg7[%c0_98, %c0_99] : memref<8x1xf32, #tpu.memory_space<vmem>>, vector<8x1xf32>
    tpu.vector_store %arg7[%c0_98, %c0_99], %80 {strides = array<i32>} : memref<8x1xf32, #tpu.memory_space<vmem>>, vector<8x1xf32>,
    %c384_i32 = arith.constant 384 : i32
    %82 = arith.muli %arg2, %c384_i32 : i32
    %83 = tpu.assume_multiple %82, 128 : i32
    %c0_100 = arith.constant 0 : index
    %c0_101 = arith.constant 0 : index
    %84 = arith.index_cast %83 : i32 to index
    %85 = vector.load %arg6[%c0_100, %c0_101, %84] : memref<1x8x384xf32, #tpu.memory_space<vmem>>, vector<1x8x288xf32>
    %86 = vector.shape_cast %85 : vector<1x8x288xf32> to vector<8x288xf32>
    %87 = vector.shape_cast %73 : vector<8x288xf32> to vector<1x8x288xf32>
    tpu.vector_store %arg6[%c0_100, %c0_101, %84], %87 {strides = array<i32>} : memref<1x8x384xf32, #tpu.memory_space<vmem>>, vector<1x8x288xf32>,
    %c0_i32_102 = arith.constant 0 : i32
    %88 = arith.cmpi eq, %arg2, %c0_i32_102 : i32
    %89 = arith.extui %88 : i1 to i32
    %c0_i32_103 = arith.constant 0 : i32
    %90 = arith.cmpi ne, %89, %c0_i32_103 : i32
    scf.if %90 {
      %c0_104 = arith.constant 0 : index
      %c0_105 = arith.constant 0 : index
      %91 = vector.load %arg7[%c0_104, %c0_105] : memref<8x1xf32, #tpu.memory_space<vmem>>, vector<8x1xf32>
      %cst_106 = arith.constant 3.906250e-03 : f32
      %92 = vector.broadcast %cst_106 : f32 to vector<8x1xf32>
      %93 = arith.mulf %91, %92 : vector<8x1xf32>
      %cst_107 = arith.constant 0.000000e+00 : f32
      %94 = vector.broadcast %cst_107 : f32 to vector<8x1xf32>
      %c0_108 = arith.constant 0 : index
      %c0_109 = arith.constant 0 : index
      %95 = vector.load %arg8[%c0_108, %c0_109] : memref<8x1xf32, #tpu.memory_space<vmem>>, vector<8x1xf32>
      tpu.vector_store %arg8[%c0_108, %c0_109], %94 {strides = array<i32>} : memref<8x1xf32, #tpu.memory_space<vmem>>, vector<8x1xf32>,
      %c0_i32_110 = arith.constant 0 : i32
      %c384_i32_111 = arith.constant 384 : i32
      %96 = arith.muli %c0_i32_110, %c384_i32_111 : i32
      %97 = tpu.assume_multiple %96, 128 : i32
      %c0_112 = arith.constant 0 : index
      %c0_113 = arith.constant 0 : index
      %98 = arith.index_cast %97 : i32 to index
      %99 = vector.load %arg6[%c0_112, %c0_113, %98] : memref<1x8x384xf32, #tpu.memory_space<vmem>>, vector<1x8x288xf32>
      %100 = vector.shape_cast %99 : vector<1x8x288xf32> to vector<8x288xf32>
      %101 = vector.broadcast %93 : vector<8x1xf32> to vector<8x288xf32>
      %102 = arith.subf %100, %101 : vector<8x288xf32>
      %103 = vector.broadcast %74 : vector<1x288xf32> to vector<8x288xf32>
      %104 = arith.mulf %102, %103 : vector<8x288xf32>
      %c0_114 = arith.constant 0 : index
      %c0_115 = arith.constant 0 : index
      %105 = vector.load %arg8[%c0_114, %c0_115] : memref<8x1xf32, #tpu.memory_space<vmem>>, vector<8x1xf32>
      %106 = arith.mulf %104, %104 : vector<8x288xf32>
      %cst_116 = arith.constant dense<0.000000e+00> : vector<8xf32>
      %107 = vector.multi_reduction <add>, %106, %cst_116 [1] : vector<8x288xf32> to vector<8xf32>
      %108 = vector.shape_cast %107 : vector<8xf32> to vector<8x1xf32>
      %109 = arith.addf %105, %108 : vector<8x1xf32>
      %c0_117 = arith.constant 0 : index
      %c0_118 = arith.constant 0 : index
      %110 = vector.load %arg8[%c0_117, %c0_118] : memref<8x1xf32, #tpu.memory_space<vmem>>, vector<8x1xf32>
      tpu.vector_store %arg8[%c0_117, %c0_118], %109 {strides = array<i32>} : memref<8x1xf32, #tpu.memory_space<vmem>>, vector<8x1xf32>,
      %c1_i32 = arith.constant 1 : i32
      %c0_119 = arith.constant 0 : index
      %c0_120 = arith.constant 0 : index
      %111 = vector.load %arg8[%c0_119, %c0_120] : memref<8x1xf32, #tpu.memory_space<vmem>>, vector<8x1xf32>
      %cst_121 = arith.constant 3.906250e-03 : f32
      %112 = vector.broadcast %cst_121 : f32 to vector<8x1xf32>
      %113 = arith.mulf %111, %112 : vector<8x1xf32>
      %cst_122 = arith.constant 9.99999974E-6 : f32
      %114 = vector.broadcast %cst_122 : f32 to vector<8x1xf32>
      %115 = arith.addf %113, %114 : vector<8x1xf32>
      %116 = math.rsqrt %115 : vector<8x1xf32>
      %c0_i32_123 = arith.constant 0 : i32
      %c384_i32_124 = arith.constant 384 : i32
      %117 = arith.muli %c0_i32_123, %c384_i32_124 : i32
      %118 = tpu.assume_multiple %117, 128 : i32
      %c0_125 = arith.constant 0 : index
      %c0_126 = arith.constant 0 : index
      %119 = arith.index_cast %118 : i32 to index
      %120 = vector.load %arg6[%c0_125, %c0_126, %119] : memref<1x8x384xf32, #tpu.memory_space<vmem>>, vector<1x8x288xf32>
      %121 = vector.shape_cast %120 : vector<1x8x288xf32> to vector<8x288xf32>
      %122 = vector.broadcast %93 : vector<8x1xf32> to vector<8x288xf32>
      %123 = arith.subf %121, %122 : vector<8x288xf32>
      %124 = vector.broadcast %116 : vector<8x1xf32> to vector<8x288xf32>
      %125 = arith.mulf %123, %124 : vector<8x288xf32>
      %126 = arith.negf %125 : vector<8x288xf32>
      %127 = math.exp %126 : vector<8x288xf32>
      %cst_127 = arith.constant 1.000000e+00 : f32
      %128 = vector.broadcast %cst_127 : f32 to vector<8x288xf32>
      %129 = arith.addf %128, %127 : vector<8x288xf32>
      %130 = arith.divf %128, %129 : vector<8x288xf32>
      %131 = arith.mulf %125, %130 : vector<8x288xf32>
      %c0_128 = arith.constant 0 : index
      %c0_129 = arith.constant 0 : index
      %132 = arith.index_cast %118 : i32 to index
      %133 = vector.load %arg6[%c0_128, %c0_129, %132] : memref<1x8x384xf32, #tpu.memory_space<vmem>>, vector<1x8x288xf32>
      %134 = vector.shape_cast %133 : vector<1x8x288xf32> to vector<8x288xf32>
      %135 = vector.shape_cast %131 : vector<8x288xf32> to vector<1x8x288xf32>
      tpu.vector_store %arg6[%c0_128, %c0_129, %132], %135 {strides = array<i32>} : memref<1x8x384xf32, #tpu.memory_space<vmem>>, vector<1x8x288xf32>,
      %c1_i32_130 = arith.constant 1 : i32
    } else {
    }
    return
  }
  func.func @transform_0(%arg0: i32, %arg1: i32, %arg2: i32) -> (i32, i32, i32, i32) {
    %c0_i32 = arith.constant 0 : i32
    %c0_i32_0 = arith.constant 0 : i32
    %c0_i32_1 = arith.constant 0 : i32
    return %arg0, %arg2, %c0_i32, %c0_i32_0 : i32, i32, i32, i32
  }
  func.func @transform_1(%arg0: i32, %arg1: i32, %arg2: i32) -> (i32, i32, i32) {
    %c0_i32 = arith.constant 0 : i32
    %c0_i32_0 = arith.constant 0 : i32
    %c0_i32_1 = arith.constant 0 : i32
    return %c0_i32, %arg1, %c0_i32_0 : i32, i32, i32
  }
  func.func @transform_2(%arg0: i32, %arg1: i32, %arg2: i32) -> (i32, i32) {
    %c0_i32 = arith.constant 0 : i32
    %c0_i32_0 = arith.constant 0 : i32
    %c0_i32_1 = arith.constant 0 : i32
    return %c0_i32, %c0_i32_0 : i32, i32
  }
  func.func @transform_3(%arg0: i32, %arg1: i32, %arg2: i32) -> (i32, i32, i32) {
    %c0_i32 = arith.constant 0 : i32
    %c0_i32_0 = arith.constant 0 : i32
    return %arg0, %arg1, %c0_i32 : i32, i32, i32
  }
}

</mosaic_0001>

<llo_original>
// kernel: conv_block_forward.1
$region0: #{conv_block_forward.1}
  #allocation0 [shape = 'u32[]', space=smem, size = 0x4, offset = 0x4, fixed_abs, tag = 'smem constant byte address 0x4 - core index']
  #allocation1 [shape = 'u32[144,128]{1,0:T(1,128)}', space=vmem, size = 0x12000, scoped, tag = 'internal scratch']
  #allocation2 [shape = 'f32[8,1]{1,0:T(8,128)}', space=vmem, size = 0x1000, scoped, tag = 'scratch operand']
  #allocation3 [shape = 'f32[8,1]{1,0:T(8,128)}', space=vmem, size = 0x1000, scoped, tag = 'scratch operand']
  #allocation4 [shape = 'f32[8,288]{1,0:T(8,128)}', space=vmem, size = 0x3000, scoped, tag = 'scratch operand']
  %s0 = inlined_call_operand.vmem [shape: bf16[2,1,4,326], index: 0, kind: input, shape index: {}]
  %s1 = inlined_call_operand.vmem [shape: bf16[9,8,4], index: 1, kind: input, shape index: {}]
  %s2 = inlined_call_operand.vmem [shape: f32[1,288], index: 2, kind: input, shape index: {}]
  %s3 = inlined_call_operand.vmem [shape: f32[2,8,384], index: 3, kind: output, shape index: {}]
  %s4 = sld [smem:[#allocation0]]
  $region53: #{conv_block_forward.1} parent=0
    _
  %s6 = ssub.s32 1, %s4
  %s7 = scalar_select 0, %s6, %s4
  loop: start=0, step=1, limit=4
  $region2: #{conv_block_forward.1} parent=0 // loop_pre_header
    _
  $region3: #{conv_block_forward.1} parent=0 // loop_header
    %s9 = sphi 0, %s13
    %p10 = scmp.ge.s32.totalorder %s9, 4
    %s16 = sphi 0, %s35
    %s17 = sphi 0, %s31
    %s18 = sphi 0, %s27
    %s19 = sphi 0, %s16
    %s20 = sphi 0, %s17
    %s21 = sphi 0, %s18
    %s22 = sphi 0, %s19
    %s23 = sphi 0, %s20
    %s24 = sphi 0, %s21
    %s40 = sphi 0, %s42
    %s43 = sphi 0, %s40
    %s44 = sphi 0, %s43
    %s60 = sphi 0, %s44
    %s66 = sphi 0, %s68
    %s69 = sphi 0, %s66
    %s70 = sphi 0, %s69
    %s86 = sphi 0, %s70
    %s90 = sphi 0, %s90
    %s92 = sphi 0, %s90
    %s93 = sphi 0, %s92
    %s107 = sphi 0, %s93
    %s115 = sphi 0, %s117
    %s118 = sphi 0, %s115
    %s119 = sphi 0, %s118
    %s135 = sphi 0, %s119
  $region4: #{conv_block_forward.1} parent=0 // loop_header_branch
    %12 = sbr.rel (%p10) target = $region8
  $region5: #{conv_block_forward.1} parent=0 // loop_body
    %s14 = ssub.s32 %s9, 1
    %s15 = ssub.s32 %s9, 2
    %s25 = sadd.s32 1, %s18
    %p26 = scmp.ge.s32.totalorder %s25, 1
    %s27 = scalar_select %p26, 0, %s25
    %s28 = sadd.s32 1, %s17
    %s29 = scalar_select %p26, %s28, %s17
    %p30 = scmp.ge.s32.totalorder %s29, 1
    %s31 = scalar_select %p30, 0, %s29
    %s32 = sadd.s32 1, %s16
    %s33 = scalar_select %p30, %s32, %s16
    %p34 = scmp.ge.s32.totalorder %s33, 2
    %s35 = scalar_select %p34, 0, %s33
    %s36 = ssub.s32 %s16, %s35
    %s37 = ssub.s32 %s18, %s27
    %s38 = sor.u32 %s36, %s37
    %p39 = scmp.eq.s32.totalorder %s38, 0
    %s41 = sadd.s32 %s40, 1
    %s42 = scalar_select %p39, %s40, %s41
    %p45 = pneg %p39
    %p46 = scmp.eq.s32.totalorder %s9, 1
    %p47 = por %p45, %p46
    %p48 = scmp.ne.s32.totalorder %s40, %s43
    %p49 = scmp.eq.s32.totalorder %s9, 0
    %p50 = por %p48, %p49
    %p51 = scmp.ne.s32.totalorder %s40, %s43
    %p52 = scmp.eq.s32.totalorder %s14, 1
    %p53 = por %p51, %p52
    %p54 = scmp.ne.s32.totalorder %s43, %s44
    %p55 = scmp.eq.s32.totalorder %s14, 0
    %p56 = por %p54, %p55
    %p57 = scmp.ne.s32.totalorder %s43, %s44
    %p58 = scmp.eq.s32.totalorder %s15, 1
    %p59 = por %p57, %p58
    %p61 = scmp.ne.s32.totalorder %s44, %s60
    %p62 = scmp.eq.s32.totalorder %s15, 0
    %p63 = por %p61, %p62
    %s64 = ssub.s32 %s17, %s31
    %p65 = scmp.eq.s32.totalorder %s64, 0
    %s67 = sadd.s32 %s66, 1
    %s68 = scalar_select %p65, %s66, %s67
    %p71 = pneg %p65
    %p72 = scmp.eq.s32.totalorder %s9, 1
    %p73 = por %p71, %p72
    %p74 = scmp.ne.s32.totalorder %s66, %s69
    %p75 = scmp.eq.s32.totalorder %s9, 0
    %p76 = por %p74, %p75
    %p77 = scmp.ne.s32.totalorder %s66, %s69
    %p78 = scmp.eq.s32.totalorder %s14, 1
    %p79 = por %p77, %p78
    %p80 = scmp.ne.s32.totalorder %s69, %s70
    %p81 = scmp.eq.s32.totalorder %s14, 0
    %p82 = por %p80, %p81
    %p83 = scmp.ne.s32.totalorder %s69, %s70
    %p84 = scmp.eq.s32.totalorder %s15, 1
    %p85 = por %p83, %p84
    %p87 = scmp.ne.s32.totalorder %s70, %s86
    %p88 = scmp.eq.s32.totalorder %s15, 0
    %p89 = por %p87, %p88
    %s91 = sadd.s32 %s90, 1
    %p94 = scmp.eq.s32.totalorder %s9, 1
    %p95 = scmp.ne.s32.totalorder %s90, %s92
    %p96 = scmp.eq.s32.totalorder %s9, 0
    %p97 = por %p95, %p96
    %p98 = scmp.ne.s32.totalorder %s90, %s92
    %p99 = scmp.eq.s32.totalorder %s14, 1
    %p100 = por %p98, %p99
    %p101 = scmp.ne.s32.totalorder %s92, %s93
    %p102 = scmp.eq.s32.totalorder %s14, 0
    %p103 = por %p101, %p102
    %p104 = scmp.ne.s32.totalorder %s92, %s93
    %p105 = scmp.eq.s32.totalorder %s15, 1
    %p106 = por %p104, %p105
    %p108 = scmp.ne.s32.totalorder %s93, %s107
    %p109 = scmp.eq.s32.totalorder %s15, 0
    %p110 = por %p108, %p109
    %s111 = ssub.s32 %s16, %s35
    %s112 = ssub.s32 %s17, %s31
    %s113 = sor.u32 %s111, %s112
    %p114 = scmp.eq.s32.totalorder %s113, 0
    %s116 = sadd.s32 %s115, 1
    %s117 = scalar_select %p114, %s115, %s116
    %p120 = pneg %p114
    %p121 = scmp.eq.s32.totalorder %s9, 1
    %p122 = por %p120, %p121
    %p123 = scmp.ne.s32.totalorder %s115, %s118
    %p124 = scmp.eq.s32.totalorder %s9, 0
    %p125 = por %p123, %p124
    %p126 = scmp.ne.s32.totalorder %s115, %s118
    %p127 = scmp.eq.s32.totalorder %s14, 1
    %p128 = por %p126, %p127
    %p129 = scmp.ne.s32.totalorder %s118, %s119
    %p130 = scmp.eq.s32.totalorder %s14, 0
    %p131 = por %p129, %p130
    %p132 = scmp.ne.s32.totalorder %s118, %s119
    %p133 = scmp.eq.s32.totalorder %s15, 1
    %p134 = por %p132, %p133
    %p136 = scmp.ne.s32.totalorder %s119, %s135
    %p137 = scmp.eq.s32.totalorder %s15, 0
    %p138 = por %p136, %p137
    %p139 = scmp.le.s32.totalorder 1, %s9
    %p140 = scmp.lt.s32.totalorder %s9, 3
    %p141 = pnand %p139, %p140
    %p142 = pneg %p141
    // Predicated region
    $region9: #{conv_block_forward.1} parent=5 // pred_check
      _
    $region10: #{conv_block_forward.1} parent=5 // pred_check_branch
      %144 = sbr.rel (%p141) target = $region12
    $region11: #{conv_block_forward.1} parent=5 // pred_region
      %s145 = ssub.s32 %s9, 1
      // Predicated region
      $region13: #{conv_block_forward.1} parent=11 // pred_check
        %p146 = pneg %p82
      $region14: #{conv_block_forward.1} parent=11 // pred_check_branch
        %148 = sbr.rel (%p146) target = $region16
      $region15: #{conv_block_forward.1} parent=11 // pred_region
        %p149 = scmp.lt.s32.totalorder %s20, 0
        %s150 = scalar_select %p149, %s20, 0
        %s151 = smul.addr %s150, 4
        %s152 = scalar_lea.vmem %s1, %s151
      $region16: #{conv_block_forward.1} parent=11 // pred_fallthru
        _
      // Predicated region
      $region17: #{conv_block_forward.1} parent=11 // pred_check
        %p153 = pneg %p103
      $region18: #{conv_block_forward.1} parent=11 // pred_check_branch
        %155 = sbr.rel (%p153) target = $region20
      $region19: #{conv_block_forward.1} parent=11 // pred_region
        _
      $region20: #{conv_block_forward.1} parent=11 // pred_fallthru
        _
    $region12: #{conv_block_forward.1} parent=5 // pred_fallthru
      _
    %p156 = scmp.lt.s32.totalorder %s9, 2
    // Predicated region
    $region21: #{conv_block_forward.1} parent=5 // pred_check
      %p157 = pneg %p156
    $region22: #{conv_block_forward.1} parent=5 // pred_check_branch
      %159 = sbr.rel (%p157) target = $region24
    $region23: #{conv_block_forward.1} parent=5 // pred_region
      // Predicated region
      $region25: #{conv_block_forward.1} parent=23 // pred_check
        %p160 = pneg %p50
      $region26: #{conv_block_forward.1} parent=23 // pred_check_branch
        %162 = sbr.rel (%p160) target = $region28
      $region27: #{conv_block_forward.1} parent=23 // pred_region
        %p163 = scmp.lt.s32.totalorder %s16, 1
        %s164 = scalar_select %p163, %s16, 1
        %p165 = scmp.lt.s32.totalorder %s18, 0
        %s166 = scalar_select %p165, %s18, 0
        %s167 = smul.addr %s166, 3
        %s168 = smul.addr %s164, 3
        %s169 = sadd.s32 %s167, %s168
        %s170 = smul.addr %s169, 2
        %s171 = scalar_lea.vmem %s0, %s170
      $region28: #{conv_block_forward.1} parent=23 // pred_fallthru
        _
    $region24: #{conv_block_forward.1} parent=5 // pred_fallthru
      _
    %p172 = scmp.le.s32.totalorder 1, %s9
    %p173 = scmp.lt.s32.totalorder %s9, 3
    %p174 = pnand %p172, %p173
    %p175 = pneg %p174
    // Predicated region
    $region29: #{conv_block_forward.1} parent=5 // pred_check
      _
    $region30: #{conv_block_forward.1} parent=5 // pred_check_branch
      %177 = sbr.rel (%p174) target = $region32
    $region31: #{conv_block_forward.1} parent=5 // pred_region
      %s178 = ssub.s32 %s9, 1
      %p179 = scmp.lt.s32.totalorder %s19, 1
      %s180 = scalar_select %p179, %s19, 1
      %p181 = scmp.lt.s32.totalorder %s21, 0
      %s182 = scalar_select %p181, %s21, 0
      %s183 = smul.addr %s182, 3
      %s184 = smul.addr %s180, 3
      %s185 = sadd.s32 %s183, %s184
      %s186 = smul.addr %s185, 2
      %s187 = scalar_lea.vmem %s0, %s186
      %p188 = pneg %p56
      %p189 = pneg %p53
      %p190 = scmp.lt.s32.totalorder %s20, 0
      %s191 = scalar_select %p190, %s20, 0
      %s192 = smul.addr %s191, 4
      %s193 = scalar_lea.vmem %s1, %s192
      %p194 = pneg %p82
      %p195 = pneg %p79
      %p196 = pneg %p103
      %p197 = pneg %p100
      %p198 = pneg %p131
      %p199 = pneg %p128
      %p200 = scmp.lt.s32.totalorder %s19, 1
      %s201 = scalar_select %p200, %s19, 1
      %p202 = scmp.lt.s32.totalorder %s20, 0
      %s203 = scalar_select %p202, %s20, 0
      %s204 = smul.addr %s203, 3
      %s205 = smul.addr %s201, 3
      %s206 = sadd.s32 %s204, %s205
      %s207 = smul.addr %s206, 8
      %s208 = scalar_lea.vmem %s3, %s207
      %p209 = scmp.lt.s32.totalorder %s19, 1
      %s210 = scalar_select %p209, %s19, 1
      %p211 = scmp.lt.s32.totalorder %s21, 0
      %s212 = scalar_select %p211, %s21, 0
      %s213 = smul.addr %s212, 3
      %s214 = smul.addr %s210, 3
      %s215 = sadd.s32 %s213, %s214
      %s216 = smul.addr %s215, 2
      %s217 = scalar_lea.vmem %s0, %s216
      %p218 = scmp.lt.s32.totalorder %s20, 0
      %s219 = scalar_select %p218, %s20, 0
      %s220 = smul.addr %s219, 4
      %s221 = scalar_lea.vmem %s1, %s220
      %p222 = scmp.lt.s32.totalorder %s19, 1
      %s223 = scalar_select %p222, %s19, 1
      %p224 = scmp.lt.s32.totalorder %s20, 0
      %s225 = scalar_select %p224, %s20, 0
      %s226 = smul.addr %s225, 3
      %s227 = smul.addr %s223, 3
      %s228 = sadd.s32 %s226, %s227
      %s229 = smul.addr %s228, 8
      %s230 = scalar_lea.vmem %s3, %s229
      %p232 = scmp.eq.s32.totalorder %s21, 0
      // Predicated region
      $region33: #{conv_block_forward.1} parent=31 // pred_check
        %p233 = pneg %p232
      $region34: #{conv_block_forward.1} parent=31 // pred_check_branch
        %235 = sbr.rel (%p233) target = $region36
      $region35: #{conv_block_forward.1} parent=31 // pred_region
        %vm236 = vcmask 7168
        %237 = vst.msk [vmem:[#allocation2] sm:$0xff] %vm236, 0.0
      $region36: #{conv_block_forward.1} parent=31 // pred_fallthru
        _
      %v238 = vld [vmem:[%s217] sm:$0x3f]
      %v239 = vld [vmem:[%s221] sm:$0xf]
      %v241 = vcombine.high %v238, %v238
      %v243 = vunpack.c.l.s4 1983009808
      %v244 = vunpack.c.0.s8 %v243
      %v245 = vlaneseq
      %v246 = vshrl.u32 %v245, 7
      %v247 = vsub.s32 %v244, %v246
      %v248 = vrot.slane %v238, %v247
      %v250 = vunpack.c.l.s4 1983009808
      %v251 = vunpack.c.0.s8 %v250
      %v252 = vlaneseq
      %v253 = vshrl.u32 %v252, 7
      %v254 = vsub.s32 %v251, %v253
      %v255 = vrot.slane %v241, %v254
      %v256 = vcombine.high %v248, %v248
      %vm257 = vcmask 31744
      %v259 = vsel %vm257, %v239, 0
      %vm261 = vcmask 1041408
      %v263 = vsel %vm261, %v248, 0
      %v266 = vsel %vm261, %v256, 0
      %v269 = vsel %vm261, %v255, 0
      %271 = vmatprep.subr.bf16.mxu0 0
      %272 = vmatpush1.bf16.msra.mxu0 0
      %273 = vmatprep.subr.bf16.mxu0 0
      %274 = vmatpush1.bf16.msra.mxu0 0
      %275 = vmatprep.subr.bf16.mxu0 0
      %276 = vmatpush1.bf16.msra.mxu0 0
      %277 = vmatprep.subr.bf16.mxu0 0
      %278 = vmatpush1.bf16.msra.mxu0 0
      %279 = vmatprep.subr.bf16.mxu0 0
      %280 = vmatpush1.bf16.msra.mxu0 0
      %281 = vmatprep.subr.bf16.mxu0 0
      %282 = vmatpush1.bf16.msra.mxu0 0
      %283 = vmatprep.subr.bf16.mxu0 0
      %284 = vmatpush1.bf16.msra.mxu0 0
      %285 = vmatprep.subr.bf16.mxu0 %v266
      %286 = vmatpush1.bf16.msra.mxu0 %v263
      %287 = vmatprep.subr.bf16.mxu0 0
      %288 = vmatpush2.bf16.msra.mxu0 0
      %289 = vmatprep.subr.bf16.mxu0 0
      %290 = vmatpush2.bf16.msra.mxu0 0
      %291 = vmatprep.subr.bf16.mxu0 0
      %292 = vmatpush2.bf16.msra.mxu0 0
      %293 = vmatprep.subr.bf16.mxu0 0
      %294 = vmatpush2.bf16.msra.mxu0 0
      %295 = vmatprep.subr.bf16.mxu0 0
      %296 = vmatpush2.bf16.msra.mxu0 0
      %297 = vmatprep.subr.bf16.mxu0 0
      %298 = vmatpush2.bf16.msra.mxu0 0
      %299 = vmatprep.subr.bf16.mxu0 0
      %300 = vmatpush2.bf16.msra.mxu0 0
      %301 = vmatprep.subr.bf16.mxu0 0
      %302 = vmatpush2.bf16.msra.mxu0 0
      %303 = vmatprep.mubr.bf16.mxu0 0
      %304 = vmatmul.mubr.bf16.gmra.mxu0 %v259
      %v305 = vpop.f32.mrf.mxu0
      %v306 = vadd.f32 0.0, %v305
      %v307 = vpop.f32.mrf.mxu0
      %v308 = vadd.f32 0.0, %v307
      %v309 = vpop.f32.mrf.mxu0
      %v310 = vpop.f32.mrf.mxu0
      %311 = vdwg.mxu0
      %312 = vmatprep.subr.bf16.mxu0 0
      %313 = vmatpush1.bf16.msra.mxu0 0
      %314 = vmatprep.subr.bf16.mxu0 0
      %315 = vmatpush1.bf16.msra.mxu0 0
      %316 = vmatprep.subr.bf16.mxu0 0
      %317 = vmatpush1.bf16.msra.mxu0 0
      %318 = vmatprep.subr.bf16.mxu0 0
      %319 = vmatpush1.bf16.msra.mxu0 0
      %320 = vmatprep.subr.bf16.mxu0 0
      %321 = vmatpush1.bf16.msra.mxu0 0
      %322 = vmatprep.subr.bf16.mxu0 0
      %323 = vmatpush1.bf16.msra.mxu0 0
      %324 = vmatprep.subr.bf16.mxu0 0
      %325 = vmatpush1.bf16.msra.mxu0 0
      %326 = vmatprep.subr.bf16.mxu0 0
      %327 = vmatpush1.bf16.msra.mxu0 %v269
      %328 = vmatprep.subr.bf16.mxu0 0
      %329 = vmatpush2.bf16.msra.mxu0 0
      %330 = vmatprep.subr.bf16.mxu0 0
      %331 = vmatpush2.bf16.msra.mxu0 0
      %332 = vmatprep.subr.bf16.mxu0 0
      %333 = vmatpush2.bf16.msra.mxu0 0
      %334 = vmatprep.subr.bf16.mxu0 0
      %335 = vmatpush2.bf16.msra.mxu0 0
      %336 = vmatprep.subr.bf16.mxu0 0
      %337 = vmatpush2.bf16.msra.mxu0 0
      %338 = vmatprep.subr.bf16.mxu0 0
      %339 = vmatpush2.bf16.msra.mxu0 0
      %340 = vmatprep.subr.bf16.mxu0 0
      %341 = vmatpush2.bf16.msra.mxu0 0
      %342 = vmatprep.subr.bf16.mxu0 0
      %343 = vmatpush2.bf16.msra.mxu0 0
      %344 = vmatprep.mubr.bf16.mxu0 0
      %345 = vmatmul.mubr.bf16.gmra.mxu0 %v259
      %v346 = vpop.f32.mrf.mxu0
      %v347 = vadd.f32 0.0, %v346
      %v348 = vpop.f32.mrf.mxu0
      %v349 = vpop.f32.mrf.mxu0
      %v350 = vpop.f32.mrf.mxu0
      %351 = vdwg.mxu0
      %352 = vst [vmem:[#allocation4] sm:$0xff] %v306
      %353 = vst [vmem:[#allocation4 + $0x8] sm:$0xff] %v308
      %vm354 = vcmask 261120
      %355 = vst.msk [vmem:[#allocation4 + $0x10] sm:$0xff] %vm354, %v347
      %v356 = vld [vmem:[%s217] sm:$0x3f]
      %s357 = scalar_lea.vmem %s221, 4
      %v358 = vld [vmem:[%s357] sm:$0xf]
      %v360 = vcombine.high %v356, %v356
      %v362 = vunpack.c.l.s4 1983009808
      %v363 = vunpack.c.0.s8 %v362
      %v364 = vlaneseq
      %v365 = vshrl.u32 %v364, 7
      %v366 = vsub.s32 %v363, %v365
      %v367 = vrot.slane %v356, %v366
      %v369 = vunpack.c.l.s4 1983009808
      %v370 = vunpack.c.0.s8 %v369
      %v371 = vlaneseq
      %v372 = vshrl.u32 %v371, 7
      %v373 = vsub.s32 %v370, %v372
      %v374 = vrot.slane %v360, %v373
      %v375 = vcombine.high %v367, %v367
      %376 = vrot.lane.b32.xlu0 %v367, 127
      %v377 = vpop.permute.xlu0 %376
      %378 = vrot.lane.b32.xlu0 %v375, 127
      %v379 = vpop.permute.xlu0 %378
      %380 = vrot.lane.b32.xlu0 %v374, 127
      %v381 = vpop.permute.xlu0 %380
      %vm382 = vcmask 1039360
      %v383 = vsel %vm382, %v377, %v379
      %v384 = vsel %vm382, %v379, %v381
      %v386 = vsel %vm257, %v358, 0
      %v389 = vsel %vm261, %v383, 0
      %v392 = vsel %vm261, %v384, 0
      %v395 = vsel %vm261, %v381, 0
      %397 = vmatprep.subr.bf16.mxu0 0
      %398 = vmatpush1.bf16.msra.mxu0 0
      %399 = vmatprep.subr.bf16.mxu0 0
      %400 = vmatpush1.bf16.msra.mxu0 0
      %401 = vmatprep.subr.bf16.mxu0 0
      %402 = vmatpush1.bf16.msra.mxu0 0
      %403 = vmatprep.subr.bf16.mxu0 0
      %404 = vmatpush1.bf16.msra.mxu0 0
      %405 = vmatprep.subr.bf16.mxu0 0
      %406 = vmatpush1.bf16.msra.mxu0 0
      %407 = vmatprep.subr.bf16.mxu0 0
      %408 = vmatpush1.bf16.msra.mxu0 0
      %409 = vmatprep.subr.bf16.mxu0 0
      %410 = vmatpush1.bf16.msra.mxu0 0
      %411 = vmatprep.subr.bf16.mxu0 %v392
      %412 = vmatpush1.bf16.msra.mxu0 %v389
      %413 = vmatprep.subr.bf16.mxu0 0
      %414 = vmatpush2.bf16.msra.mxu0 0
      %415 = vmatprep.subr.bf16.mxu0 0
      %416 = vmatpush2.bf16.msra.mxu0 0
      %417 = vmatprep.subr.bf16.mxu0 0
      %418 = vmatpush2.bf16.msra.mxu0 0
      %419 = vmatprep.subr.bf16.mxu0 0
      %420 = vmatpush2.bf16.msra.mxu0 0
      %421 = vmatprep.subr.bf16.mxu0 0
      %422 = vmatpush2.bf16.msra.mxu0 0
      %423 = vmatprep.subr.bf16.mxu0 0
      %424 = vmatpush2.bf16.msra.mxu0 0
      %425 = vmatprep.subr.bf16.mxu0 0
      %426 = vmatpush2.bf16.msra.mxu0 0
      %427 = vmatprep.subr.bf16.mxu0 0
      %428 = vmatpush2.bf16.msra.mxu0 0
      %429 = vmatprep.mubr.bf16.mxu0 0
      %430 = vmatmul.mubr.bf16.gmra.mxu0 %v386
      %v431 = vpop.f32.mrf.mxu0
      %v432 = vadd.f32 0.0, %v431
      %v433 = vpop.f32.mrf.mxu0
      %v434 = vadd.f32 0.0, %v433
      %v435 = vpop.f32.mrf.mxu0
      %v436 = vpop.f32.mrf.mxu0
      %437 = vdwg.mxu0
      %438 = vmatprep.subr.bf16.mxu0 0
      %439 = vmatpush1.bf16.msra.mxu0 0
      %440 = vmatprep.subr.bf16.mxu0 0
      %441 = vmatpush1.bf16.msra.mxu0 0
      %442 = vmatprep.subr.bf16.mxu0 0
      %443 = vmatpush1.bf16.msra.mxu0 0
      %444 = vmatprep.subr.bf16.mxu0 0
      %445 = vmatpush1.bf16.msra.mxu0 0
      %446 = vmatprep.subr.bf16.mxu0 0
      %447 = vmatpush1.bf16.msra.mxu0 0
      %448 = vmatprep.subr.bf16.mxu0 0
      %449 = vmatpush1.bf16.msra.mxu0 0
      %450 = vmatprep.subr.bf16.mxu0 0
      %451 = vmatpush1.bf16.msra.mxu0 0
      %452 = vmatprep.subr.bf16.mxu0 0
      %453 = vmatpush1.bf16.msra.mxu0 %v395
      %454 = vmatprep.subr.bf16.mxu0 0
      %455 = vmatpush2.bf16.msra.mxu0 0
      %456 = vmatprep.subr.bf16.mxu0 0
      %457 = vmatpush2.bf16.msra.mxu0 0
      %458 = vmatprep.subr.bf16.mxu0 0
      %459 = vmatpush2.bf16.msra.mxu0 0
      %460 = vmatprep.subr.bf16.mxu0 0
      %461 = vmatpush2.bf16.msra.mxu0 0
      %462 = vmatprep.subr.bf16.mxu0 0
      %463 = vmatpush2.bf16.msra.mxu0 0
      %464 = vmatprep.subr.bf16.mxu0 0
      %465 = vmatpush2.bf16.msra.mxu0 0
      %466 = vmatprep.subr.bf16.mxu0 0
      %467 = vmatpush2.bf16.msra.mxu0 0
      %468 = vmatprep.subr.bf16.mxu0 0
      %469 = vmatpush2.bf16.msra.mxu0 0
      %470 = vmatprep.mubr.bf16.mxu0 0
      %471 = vmatmul.mubr.bf16.gmra.mxu0 %v386
      %v472 = vpop.f32.mrf.mxu0
      %v473 = vadd.f32 0.0, %v472
      %v474 = vpop.f32.mrf.mxu0
      %v475 = vpop.f32.mrf.mxu0
      %v476 = vpop.f32.mrf.mxu0
      %477 = vdwg.mxu0
      %v478 = vld [vmem:[#allocation4] sm:$0xff]
      %v479 = vld [vmem:[#allocation4 + $0x8] sm:$0xff]
      %v480 = vld [vmem:[#allocation4 + $0x10] sm:$0xff]
      %v481 = vadd.f32 %v478, %v432
      %v482 = vadd.f32 %v479, %v434
      %v483 = vadd.f32 %v480, %v473
      %484 = vst [vmem:[#allocation4] sm:$0xff] %v481
      %485 = vst [vmem:[#allocation4 + $0x8] sm:$0xff] %v482
      %486 = vst.msk [vmem:[#allocation4 + $0x10] sm:$0xff] %vm354, %v483
      %v487 = vld [vmem:[%s217] sm:$0x3f]
      %s488 = scalar_lea.vmem %s221, 8
      %v489 = vld [vmem:[%s488] sm:$0xf]
      %v491 = vcombine.high %v487, %v487
      %v493 = vunpack.c.l.s4 1983009808
      %v494 = vunpack.c.0.s8 %v493
      %v495 = vlaneseq
      %v496 = vshrl.u32 %v495, 7
      %v497 = vsub.s32 %v494, %v496
      %v498 = vrot.slane %v487, %v497
      %v500 = vunpack.c.l.s4 1983009808
      %v501 = vunpack.c.0.s8 %v500
      %v502 = vlaneseq
      %v503 = vshrl.u32 %v502, 7
      %v504 = vsub.s32 %v501, %v503
      %v505 = vrot.slane %v491, %v504
      %v506 = vcombine.high %v498, %v498
      %507 = vrot.lane.b32.xlu0 %v498, 126
      %v508 = vpop.permute.xlu0 %507
      %509 = vrot.lane.b32.xlu0 %v506, 126
      %v510 = vpop.permute.xlu0 %509
      %511 = vrot.lane.b32.xlu0 %v505, 126
      %v512 = vpop.permute.xlu0 %511
      %vm513 = vcmask 1031168
      %v514 = vsel %vm513, %v508, %v510
      %v515 = vsel %vm513, %v510, %v512
      %v517 = vsel %vm257, %v489, 0
      %v520 = vsel %vm261, %v514, 0
      %v523 = vsel %vm261, %v515, 0
      %v526 = vsel %vm261, %v512, 0
      %528 = vmatprep.subr.bf16.mxu0 0
      %529 = vmatpush1.bf16.msra.mxu0 0
      %530 = vmatprep.subr.bf16.mxu0 0
      %531 = vmatpush1.bf16.msra.mxu0 0
      %532 = vmatprep.subr.bf16.mxu0 0
      %533 = vmatpush1.bf16.msra.mxu0 0
      %534 = vmatprep.subr.bf16.mxu0 0
      %535 = vmatpush1.bf16.msra.mxu0 0
      %536 = vmatprep.subr.bf16.mxu0 0
      %537 = vmatpush1.bf16.msra.mxu0 0
      %538 = vmatprep.subr.bf16.mxu0 0
      %539 = vmatpush1.bf16.msra.mxu0 0
      %540 = vmatprep.subr.bf16.mxu0 0
      %541 = vmatpush1.bf16.msra.mxu0 0
      %542 = vmatprep.subr.bf16.mxu0 %v523
      %543 = vmatpush1.bf16.msra.mxu0 %v520
      %544 = vmatprep.subr.bf16.mxu0 0
      %545 = vmatpush2.bf16.msra.mxu0 0
      %546 = vmatprep.subr.bf16.mxu0 0
      %547 = vmatpush2.bf16.msra.mxu0 0
      %548 = vmatprep.subr.bf16.mxu0 0
      %549 = vmatpush2.bf16.msra.mxu0 0
      %550 = vmatprep.subr.bf16.mxu0 0
      %551 = vmatpush2.bf16.msra.mxu0 0
      %552 = vmatprep.subr.bf16.mxu0 0
      %553 = vmatpush2.bf16.msra.mxu0 0
      %554 = vmatprep.subr.bf16.mxu0 0
      %555 = vmatpush2.bf16.msra.mxu0 0
      %556 = vmatprep.subr.bf16.mxu0 0
      %557 = vmatpush2.bf16.msra.mxu0 0
      %558 = vmatprep.subr.bf16.mxu0 0
      %559 = vmatpush2.bf16.msra.mxu0 0
      %560 = vmatprep.mubr.bf16.mxu0 0
      %561 = vmatmul.mubr.bf16.gmra.mxu0 %v517
      %v562 = vpop.f32.mrf.mxu0
      %v563 = vadd.f32 0.0, %v562
      %v564 = vpop.f32.mrf.mxu0
      %v565 = vadd.f32 0.0, %v564
      %v566 = vpop.f32.mrf.mxu0
      %v567 = vpop.f32.mrf.mxu0
      %568 = vdwg.mxu0
      %569 = vmatprep.subr.bf16.mxu0 0
      %570 = vmatpush1.bf16.msra.mxu0 0
      %571 = vmatprep.subr.bf16.mxu0 0
      %572 = vmatpush1.bf16.msra.mxu0 0
      %573 = vmatprep.subr.bf16.mxu0 0
      %574 = vmatpush1.bf16.msra.mxu0 0
      %575 = vmatprep.subr.bf16.mxu0 0
      %576 = vmatpush1.bf16.msra.mxu0 0
      %577 = vmatprep.subr.bf16.mxu0 0
      %578 = vmatpush1.bf16.msra.mxu0 0
      %579 = vmatprep.subr.bf16.mxu0 0
      %580 = vmatpush1.bf16.msra.mxu0 0
      %581 = vmatprep.subr.bf16.mxu0 0
      %582 = vmatpush1.bf16.msra.mxu0 0
      %583 = vmatprep.subr.bf16.mxu0 0
      %584 = vmatpush1.bf16.msra.mxu0 %v526
      %585 = vmatprep.subr.bf16.mxu0 0
      %586 = vmatpush2.bf16.msra.mxu0 0
      %587 = vmatprep.subr.bf16.mxu0 0
      %588 = vmatpush2.bf16.msra.mxu0 0
      %589 = vmatprep.subr.bf16.mxu0 0
      %590 = vmatpush2.bf16.msra.mxu0 0
      %591 = vmatprep.subr.bf16.mxu0 0
      %592 = vmatpush2.bf16.msra.mxu0 0
      %593 = vmatprep.subr.bf16.mxu0 0
      %594 = vmatpush2.bf16.msra.mxu0 0
      %595 = vmatprep.subr.bf16.mxu0 0
      %596 = vmatpush2.bf16.msra.mxu0 0
      %597 = vmatprep.subr.bf16.mxu0 0
      %598 = vmatpush2.bf16.msra.mxu0 0
      %599 = vmatprep.subr.bf16.mxu0 0
      %600 = vmatpush2.bf16.msra.mxu0 0
      %601 = vmatprep.mubr.bf16.mxu0 0
      %602 = vmatmul.mubr.bf16.gmra.mxu0 %v517
      %v603 = vpop.f32.mrf.mxu0
      %v604 = vadd.f32 0.0, %v603
      %v605 = vpop.f32.mrf.mxu0
      %v606 = vpop.f32.mrf.mxu0
      %v607 = vpop.f32.mrf.mxu0
      %608 = vdwg.mxu0
      %v609 = vld [vmem:[#allocation4] sm:$0xff]
      %v610 = vld [vmem:[#allocation4 + $0x8] sm:$0xff]
      %v611 = vld [vmem:[#allocation4 + $0x10] sm:$0xff]
      %v612 = vadd.f32 %v609, %v563
      %v613 = vadd.f32 %v610, %v565
      %v614 = vadd.f32 %v611, %v604
      %615 = vst [vmem:[#allocation4] sm:$0xff] %v612
      %616 = vst [vmem:[#allocation4 + $0x8] sm:$0xff] %v613
      %617 = vst.msk [vmem:[#allocation4 + $0x10] sm:$0xff] %vm354, %v614
      %v618 = vld [vmem:[%s217] sm:$0x3f]
      %s619 = scalar_lea.vmem %s221, 12
      %v620 = vld [vmem:[%s619] sm:$0xf]
      %v622 = vcombine.high %v618, %v618
      %v624 = vunpack.c.l.s4 1983009808
      %v625 = vunpack.c.0.s8 %v624
      %v626 = vlaneseq
      %v627 = vshrl.u32 %v626, 7
      %v628 = vsub.s32 %v625, %v627
      %v629 = vrot.slane %v618, %v628
      %v631 = vunpack.c.l.s4 1983009808
      %v632 = vunpack.c.0.s8 %v631
      %v633 = vlaneseq
      %v634 = vshrl.u32 %v633, 7
      %v635 = vsub.s32 %v632, %v634
      %v636 = vrot.slane %v622, %v635
      %v637 = vcombine.high %v629, %v629
      %638 = vrot.lane.b32.xlu0 %v629, 110
      %v639 = vpop.permute.xlu0 %638
      %640 = vrot.lane.b32.xlu0 %v637, 110
      %v641 = vpop.permute.xlu0 %640
      %642 = vrot.lane.b32.xlu0 %v636, 110
      %v643 = vpop.permute.xlu0 %642
      %vm644 = vcmask 900096
      %v645 = vsel %vm644, %v639, %v641
      %v646 = vsel %vm644, %v641, %v643
      %v648 = vsel %vm257, %v620, 0
      %v651 = vsel %vm261, %v645, 0
      %v654 = vsel %vm261, %v646, 0
      %v657 = vsel %vm261, %v643, 0
      %659 = vmatprep.subr.bf16.mxu0 0
      %660 = vmatpush1.bf16.msra.mxu0 0
      %661 = vmatprep.subr.bf16.mxu0 0
      %662 = vmatpush1.bf16.msra.mxu0 0
      %663 = vmatprep.subr.bf16.mxu0 0
      %664 = vmatpush1.bf16.msra.mxu0 0
      %665 = vmatprep.subr.bf16.mxu0 0
      %666 = vmatpush1.bf16.msra.mxu0 0
      %667 = vmatprep.subr.bf16.mxu0 0
      %668 = vmatpush1.bf16.msra.mxu0 0
      %669 = vmatprep.subr.bf16.mxu0 0
      %670 = vmatpush1.bf16.msra.mxu0 0
      %671 = vmatprep.subr.bf16.mxu0 0
      %672 = vmatpush1.bf16.msra.mxu0 0
      %673 = vmatprep.subr.bf16.mxu0 %v654
      %674 = vmatpush1.bf16.msra.mxu0 %v651
      %675 = vmatprep.subr.bf16.mxu0 0
      %676 = vmatpush2.bf16.msra.mxu0 0
      %677 = vmatprep.subr.bf16.mxu0 0
      %678 = vmatpush2.bf16.msra.mxu0 0
      %679 = vmatprep.subr.bf16.mxu0 0
      %680 = vmatpush2.bf16.msra.mxu0 0
      %681 = vmatprep.subr.bf16.mxu0 0
      %682 = vmatpush2.bf16.msra.mxu0 0
      %683 = vmatprep.subr.bf16.mxu0 0
      %684 = vmatpush2.bf16.msra.mxu0 0
      %685 = vmatprep.subr.bf16.mxu0 0
      %686 = vmatpush2.bf16.msra.mxu0 0
      %687 = vmatprep.subr.bf16.mxu0 0
      %688 = vmatpush2.bf16.msra.mxu0 0
      %689 = vmatprep.subr.bf16.mxu0 0
      %690 = vmatpush2.bf16.msra.mxu0 0
      %691 = vmatprep.mubr.bf16.mxu0 0
      %692 = vmatmul.mubr.bf16.gmra.mxu0 %v648
      %v693 = vpop.f32.mrf.mxu0
      %v694 = vadd.f32 0.0, %v693
      %v695 = vpop.f32.mrf.mxu0
      %v696 = vadd.f32 0.0, %v695
      %v697 = vpop.f32.mrf.mxu0
      %v698 = vpop.f32.mrf.mxu0
      %699 = vdwg.mxu0
      %700 = vmatprep.subr.bf16.mxu0 0
      %701 = vmatpush1.bf16.msra.mxu0 0
      %702 = vmatprep.subr.bf16.mxu0 0
      %703 = vmatpush1.bf16.msra.mxu0 0
      %704 = vmatprep.subr.bf16.mxu0 0
      %705 = vmatpush1.bf16.msra.mxu0 0
      %706 = vmatprep.subr.bf16.mxu0 0
      %707 = vmatpush1.bf16.msra.mxu0 0
      %708 = vmatprep.subr.bf16.mxu0 0
      %709 = vmatpush1.bf16.msra.mxu0 0
      %710 = vmatprep.subr.bf16.mxu0 0
      %711 = vmatpush1.bf16.msra.mxu0 0
      %712 = vmatprep.subr.bf16.mxu0 0
      %713 = vmatpush1.bf16.msra.mxu0 0
      %714 = vmatprep.subr.bf16.mxu0 0
      %715 = vmatpush1.bf16.msra.mxu0 %v657
      %716 = vmatprep.subr.bf16.mxu0 0
      %717 = vmatpush2.bf16.msra.mxu0 0
      %718 = vmatprep.subr.bf16.mxu0 0
      %719 = vmatpush2.bf16.msra.mxu0 0
      %720 = vmatprep.subr.bf16.mxu0 0
      %721 = vmatpush2.bf16.msra.mxu0 0
      %722 = vmatprep.subr.bf16.mxu0 0
      %723 = vmatpush2.bf16.msra.mxu0 0
      %724 = vmatprep.subr.bf16.mxu0 0
      %725 = vmatpush2.bf16.msra.mxu0 0
      %726 = vmatprep.subr.bf16.mxu0 0
      %727 = vmatpush2.bf16.msra.mxu0 0
      %728 = vmatprep.subr.bf16.mxu0 0
      %729 = vmatpush2.bf16.msra.mxu0 0
      %730 = vmatprep.subr.bf16.mxu0 0
      %731 = vmatpush2.bf16.msra.mxu0 0
      %732 = vmatprep.mubr.bf16.mxu0 0
      %733 = vmatmul.mubr.bf16.gmra.mxu0 %v648
      %v734 = vpop.f32.mrf.mxu0
      %v735 = vadd.f32 0.0, %v734
      %v736 = vpop.f32.mrf.mxu0
      %v737 = vpop.f32.mrf.mxu0
      %v738 = vpop.f32.mrf.mxu0
      %739 = vdwg.mxu0
      %v740 = vld [vmem:[#allocation4] sm:$0xff]
      %v741 = vld [vmem:[#allocation4 + $0x8] sm:$0xff]
      %v742 = vld [vmem:[#allocation4 + $0x10] sm:$0xff]
      %v743 = vadd.f32 %v740, %v694
      %v744 = vadd.f32 %v741, %v696
      %v745 = vadd.f32 %v742, %v735
      %746 = vst [vmem:[#allocation4] sm:$0xff] %v743
      %747 = vst [vmem:[#allocation4 + $0x8] sm:$0xff] %v744
      %748 = vst.msk [vmem:[#allocation4 + $0x10] sm:$0xff] %vm354, %v745
      %v749 = vld [vmem:[%s217] sm:$0x3f]
      %s750 = scalar_lea.vmem %s221, 16
      %v751 = vld [vmem:[%s750] sm:$0xf]
      %v753 = vcombine.high %v749, %v749
      %v755 = vunpack.c.l.s4 1983009808
      %v756 = vunpack.c.0.s8 %v755
      %v757 = vlaneseq
      %v758 = vshrl.u32 %v757, 7
      %v759 = vsub.s32 %v756, %v758
      %v760 = vrot.slane %v749, %v759
      %v762 = vunpack.c.l.s4 1983009808
      %v763 = vunpack.c.0.s8 %v762
      %v764 = vlaneseq
      %v765 = vshrl.u32 %v764, 7
      %v766 = vsub.s32 %v763, %v765
      %v767 = vrot.slane %v753, %v766
      %v768 = vcombine.high %v760, %v760
      %769 = vrot.lane.b32.xlu0 %v760, 109
      %v770 = vpop.permute.xlu0 %769
      %771 = vrot.lane.b32.xlu0 %v768, 109
      %v772 = vpop.permute.xlu0 %771
      %773 = vrot.lane.b32.xlu0 %v767, 109
      %v774 = vpop.permute.xlu0 %773
      %vm775 = vcmask 891904
      %v776 = vsel %vm775, %v770, %v772
      %v777 = vsel %vm775, %v772, %v774
      %v779 = vsel %vm257, %v751, 0
      %v782 = vsel %vm261, %v776, 0
      %v785 = vsel %vm261, %v777, 0
      %v788 = vsel %vm261, %v774, 0
      %790 = vmatprep.subr.bf16.mxu0 0
      %791 = vmatpush1.bf16.msra.mxu0 0
      %792 = vmatprep.subr.bf16.mxu0 0
      %793 = vmatpush1.bf16.msra.mxu0 0
      %794 = vmatprep.subr.bf16.mxu0 0
      %795 = vmatpush1.bf16.msra.mxu0 0
      %796 = vmatprep.subr.bf16.mxu0 0
      %797 = vmatpush1.bf16.msra.mxu0 0
      %798 = vmatprep.subr.bf16.mxu0 0
      %799 = vmatpush1.bf16.msra.mxu0 0
      %800 = vmatprep.subr.bf16.mxu0 0
      %801 = vmatpush1.bf16.msra.mxu0 0
      %802 = vmatprep.subr.bf16.mxu0 0
      %803 = vmatpush1.bf16.msra.mxu0 0
      %804 = vmatprep.subr.bf16.mxu0 %v785
      %805 = vmatpush1.bf16.msra.mxu0 %v782
      %806 = vmatprep.subr.bf16.mxu0 0
      %807 = vmatpush2.bf16.msra.mxu0 0
      %808 = vmatprep.subr.bf16.mxu0 0
      %809 = vmatpush2.bf16.msra.mxu0 0
      %810 = vmatprep.subr.bf16.mxu0 0
      %811 = vmatpush2.bf16.msra.mxu0 0
      %812 = vmatprep.subr.bf16.mxu0 0
      %813 = vmatpush2.bf16.msra.mxu0 0
      %814 = vmatprep.subr.bf16.mxu0 0
      %815 = vmatpush2.bf16.msra.mxu0 0
      %816 = vmatprep.subr.bf16.mxu0 0
      %817 = vmatpush2.bf16.msra.mxu0 0
      %818 = vmatprep.subr.bf16.mxu0 0
      %819 = vmatpush2.bf16.msra.mxu0 0
      %820 = vmatprep.subr.bf16.mxu0 0
      %821 = vmatpush2.bf16.msra.mxu0 0
      %822 = vmatprep.mubr.bf16.mxu0 0
      %823 = vmatmul.mubr.bf16.gmra.mxu0 %v779
      %v824 = vpop.f32.mrf.mxu0
      %v825 = vadd.f32 0.0, %v824
      %v826 = vpop.f32.mrf.mxu0
      %v827 = vadd.f32 0.0, %v826
      %v828 = vpop.f32.mrf.mxu0
      %v829 = vpop.f32.mrf.mxu0
      %830 = vdwg.mxu0
      %831 = vmatprep.subr.bf16.mxu0 0
      %832 = vmatpush1.bf16.msra.mxu0 0
      %833 = vmatprep.subr.bf16.mxu0 0
      %834 = vmatpush1.bf16.msra.mxu0 0
      %835 = vmatprep.subr.bf16.mxu0 0
      %836 = vmatpush1.bf16.msra.mxu0 0
      %837 = vmatprep.subr.bf16.mxu0 0
      %838 = vmatpush1.bf16.msra.mxu0 0
      %839 = vmatprep.subr.bf16.mxu0 0
      %840 = vmatpush1.bf16.msra.mxu0 0
      %841 = vmatprep.subr.bf16.mxu0 0
      %842 = vmatpush1.bf16.msra.mxu0 0
      %843 = vmatprep.subr.bf16.mxu0 0
      %844 = vmatpush1.bf16.msra.mxu0 0
      %845 = vmatprep.subr.bf16.mxu0 0
      %846 = vmatpush1.bf16.msra.mxu0 %v788
      %847 = vmatprep.subr.bf16.mxu0 0
      %848 = vmatpush2.bf16.msra.mxu0 0
      %849 = vmatprep.subr.bf16.mxu0 0
      %850 = vmatpush2.bf16.msra.mxu0 0
      %851 = vmatprep.subr.bf16.mxu0 0
      %852 = vmatpush2.bf16.msra.mxu0 0
      %853 = vmatprep.subr.bf16.mxu0 0
      %854 = vmatpush2.bf16.msra.mxu0 0
      %855 = vmatprep.subr.bf16.mxu0 0
      %856 = vmatpush2.bf16.msra.mxu0 0
      %857 = vmatprep.subr.bf16.mxu0 0
      %858 = vmatpush2.bf16.msra.mxu0 0
      %859 = vmatprep.subr.bf16.mxu0 0
      %860 = vmatpush2.bf16.msra.mxu0 0
      %861 = vmatprep.subr.bf16.mxu0 0
      %862 = vmatpush2.bf16.msra.mxu0 0
      %863 = vmatprep.mubr.bf16.mxu0 0
      %864 = vmatmul.mubr.bf16.gmra.mxu0 %v779
      %v865 = vpop.f32.mrf.mxu0
      %v866 = vadd.f32 0.0, %v865
      %v867 = vpop.f32.mrf.mxu0
      %v868 = vpop.f32.mrf.mxu0
      %v869 = vpop.f32.mrf.mxu0
      %870 = vdwg.mxu0
      %v871 = vld [vmem:[#allocation4] sm:$0xff]
      %v872 = vld [vmem:[#allocation4 + $0x8] sm:$0xff]
      %v873 = vld [vmem:[#allocation4 + $0x10] sm:$0xff]
      %v874 = vadd.f32 %v871, %v825
      %v875 = vadd.f32 %v872, %v827
      %v876 = vadd.f32 %v873, %v866
      %877 = vst [vmem:[#allocation4] sm:$0xff] %v874
      %878 = vst [vmem:[#allocation4 + $0x8] sm:$0xff] %v875
      %879 = vst.msk [vmem:[#allocation4 + $0x10] sm:$0xff] %vm354, %v876
      %v880 = vld [vmem:[%s217] sm:$0x3f]
      %s881 = scalar_lea.vmem %s221, 20
      %v882 = vld [vmem:[%s881] sm:$0xf]
      %v884 = vcombine.high %v880, %v880
      %v886 = vunpack.c.l.s4 1983009808
      %v887 = vunpack.c.0.s8 %v886
      %v888 = vlaneseq
      %v889 = vshrl.u32 %v888, 7
      %v890 = vsub.s32 %v887, %v889
      %v891 = vrot.slane %v880, %v890
      %v893 = vunpack.c.l.s4 1983009808
      %v894 = vunpack.c.0.s8 %v893
      %v895 = vlaneseq
      %v896 = vshrl.u32 %v895, 7
      %v897 = vsub.s32 %v894, %v896
      %v898 = vrot.slane %v884, %v897
      %v899 = vcombine.high %v891, %v891
      %900 = vrot.lane.b32.xlu0 %v891, 108
      %v901 = vpop.permute.xlu0 %900
      %902 = vrot.lane.b32.xlu0 %v899, 108
      %v903 = vpop.permute.xlu0 %902
      %904 = vrot.lane.b32.xlu0 %v898, 108
      %v905 = vpop.permute.xlu0 %904
      %vm906 = vcmask 883712
      %v907 = vsel %vm906, %v901, %v903
      %v908 = vsel %vm906, %v903, %v905
      %v910 = vsel %vm257, %v882, 0
      %v913 = vsel %vm261, %v907, 0
      %v916 = vsel %vm261, %v908, 0
      %v919 = vsel %vm261, %v905, 0
      %921 = vmatprep.subr.bf16.mxu0 0
      %922 = vmatpush1.bf16.msra.mxu0 0
      %923 = vmatprep.subr.bf16.mxu0 0
      %924 = vmatpush1.bf16.msra.mxu0 0
      %925 = vmatprep.subr.bf16.mxu0 0
      %926 = vmatpush1.bf16.msra.mxu0 0
      %927 = vmatprep.subr.bf16.mxu0 0
      %928 = vmatpush1.bf16.msra.mxu0 0
      %929 = vmatprep.subr.bf16.mxu0 0
      %930 = vmatpush1.bf16.msra.mxu0 0
      %931 = vmatprep.subr.bf16.mxu0 0
      %932 = vmatpush1.bf16.msra.mxu0 0
      %933 = vmatprep.subr.bf16.mxu0 0
      %934 = vmatpush1.bf16.msra.mxu0 0
      %935 = vmatprep.subr.bf16.mxu0 %v916
      %936 = vmatpush1.bf16.msra.mxu0 %v913
      %937 = vmatprep.subr.bf16.mxu0 0
      %938 = vmatpush2.bf16.msra.mxu0 0
      %939 = vmatprep.subr.bf16.mxu0 0
      %940 = vmatpush2.bf16.msra.mxu0 0
      %941 = vmatprep.subr.bf16.mxu0 0
      %942 = vmatpush2.bf16.msra.mxu0 0
      %943 = vmatprep.subr.bf16.mxu0 0
      %944 = vmatpush2.bf16.msra.mxu0 0
      %945 = vmatprep.subr.bf16.mxu0 0
      %946 = vmatpush2.bf16.msra.mxu0 0
      %947 = vmatprep.subr.bf16.mxu0 0
      %948 = vmatpush2.bf16.msra.mxu0 0
      %949 = vmatprep.subr.bf16.mxu0 0
      %950 = vmatpush2.bf16.msra.mxu0 0
      %951 = vmatprep.subr.bf16.mxu0 0
      %952 = vmatpush2.bf16.msra.mxu0 0
      %953 = vmatprep.mubr.bf16.mxu0 0
      %954 = vmatmul.mubr.bf16.gmra.mxu0 %v910
      %v955 = vpop.f32.mrf.mxu0
      %v956 = vadd.f32 0.0, %v955
      %v957 = vpop.f32.mrf.mxu0
      %v958 = vadd.f32 0.0, %v957
      %v959 = vpop.f32.mrf.mxu0
      %v960 = vpop.f32.mrf.mxu0
      %961 = vdwg.mxu0
      %962 = vmatprep.subr.bf16.mxu0 0
      %963 = vmatpush1.bf16.msra.mxu0 0
      %964 = vmatprep.subr.bf16.mxu0 0
      %965 = vmatpush1.bf16.msra.mxu0 0
      %966 = vmatprep.subr.bf16.mxu0 0
      %967 = vmatpush1.bf16.msra.mxu0 0
      %968 = vmatprep.subr.bf16.mxu0 0
      %969 = vmatpush1.bf16.msra.mxu0 0
      %970 = vmatprep.subr.bf16.mxu0 0
      %971 = vmatpush1.bf16.msra.mxu0 0
      %972 = vmatprep.subr.bf16.mxu0 0
      %973 = vmatpush1.bf16.msra.mxu0 0
      %974 = vmatprep.subr.bf16.mxu0 0
      %975 = vmatpush1.bf16.msra.mxu0 0
      %976 = vmatprep.subr.bf16.mxu0 0
      %977 = vmatpush1.bf16.msra.mxu0 %v919
      %978 = vmatprep.subr.bf16.mxu0 0
      %979 = vmatpush2.bf16.msra.mxu0 0
      %980 = vmatprep.subr.bf16.mxu0 0
      %981 = vmatpush2.bf16.msra.mxu0 0
      %982 = vmatprep.subr.bf16.mxu0 0
      %983 = vmatpush2.bf16.msra.mxu0 0
      %984 = vmatprep.subr.bf16.mxu0 0
      %985 = vmatpush2.bf16.msra.mxu0 0
      %986 = vmatprep.subr.bf16.mxu0 0
      %987 = vmatpush2.bf16.msra.mxu0 0
      %988 = vmatprep.subr.bf16.mxu0 0
      %989 = vmatpush2.bf16.msra.mxu0 0
      %990 = vmatprep.subr.bf16.mxu0 0
      %991 = vmatpush2.bf16.msra.mxu0 0
      %992 = vmatprep.subr.bf16.mxu0 0
      %993 = vmatpush2.bf16.msra.mxu0 0
      %994 = vmatprep.mubr.bf16.mxu0 0
      %995 = vmatmul.mubr.bf16.gmra.mxu0 %v910
      %v996 = vpop.f32.mrf.mxu0
      %v997 = vadd.f32 0.0, %v996
      %v998 = vpop.f32.mrf.mxu0
      %v999 = vpop.f32.mrf.mxu0
      %v1000 = vpop.f32.mrf.mxu0
      %1001 = vdwg.mxu0
      %v1002 = vld [vmem:[#allocation4] sm:$0xff]
      %v1003 = vld [vmem:[#allocation4 + $0x8] sm:$0xff]
      %v1004 = vld [vmem:[#allocation4 + $0x10] sm:$0xff]
      %v1005 = vadd.f32 %v1002, %v956
      %v1006 = vadd.f32 %v1003, %v958
      %v1007 = vadd.f32 %v1004, %v997
      %1008 = vst [vmem:[#allocation4] sm:$0xff] %v1005
      %1009 = vst [vmem:[#allocation4 + $0x8] sm:$0xff] %v1006
      %1010 = vst.msk [vmem:[#allocation4 + $0x10] sm:$0xff] %vm354, %v1007
      %v1011 = vld [vmem:[%s217] sm:$0x3f]
      %s1012 = scalar_lea.vmem %s221, 24
      %v1013 = vld [vmem:[%s1012] sm:$0xf]
      %v1015 = vcombine.high %v1011, %v1011
      %v1017 = vunpack.c.l.s4 1983009808
      %v1018 = vunpack.c.0.s8 %v1017
      %v1019 = vlaneseq
      %v1020 = vshrl.u32 %v1019, 7
      %v1021 = vsub.s32 %v1018, %v1020
      %v1022 = vrot.slane %v1011, %v1021
      %v1024 = vunpack.c.l.s4 1983009808
      %v1025 = vunpack.c.0.s8 %v1024
      %v1026 = vlaneseq
      %v1027 = vshrl.u32 %v1026, 7
      %v1028 = vsub.s32 %v1025, %v1027
      %v1029 = vrot.slane %v1015, %v1028
      %v1030 = vcombine.high %v1022, %v1022
      %1031 = vrot.lane.b32.xlu0 %v1022, 92
      %v1032 = vpop.permute.xlu0 %1031
      %1033 = vrot.lane.b32.xlu0 %v1030, 92
      %v1034 = vpop.permute.xlu0 %1033
      %1035 = vrot.lane.b32.xlu0 %v1029, 92
      %v1036 = vpop.permute.xlu0 %1035
      %vm1037 = vcmask 752640
      %v1038 = vsel %vm1037, %v1032, %v1034
      %v1039 = vsel %vm1037, %v1034, %v1036
      %v1041 = vsel %vm257, %v1013, 0
      %v1044 = vsel %vm261, %v1038, 0
      %v1047 = vsel %vm261, %v1039, 0
      %v1050 = vsel %vm261, %v1036, 0
      %1052 = vmatprep.subr.bf16.mxu0 0
      %1053 = vmatpush1.bf16.msra.mxu0 0
      %1054 = vmatprep.subr.bf16.mxu0 0
      %1055 = vmatpush1.bf16.msra.mxu0 0
      %1056 = vmatprep.subr.bf16.mxu0 0
      %1057 = vmatpush1.bf16.msra.mxu0 0
      %1058 = vmatprep.subr.bf16.mxu0 0
      %1059 = vmatpush1.bf16.msra.mxu0 0
      %1060 = vmatprep.subr.bf16.mxu0 0
      %1061 = vmatpush1.bf16.msra.mxu0 0
      %1062 = vmatprep.subr.bf16.mxu0 0
      %1063 = vmatpush1.bf16.msra.mxu0 0
      %1064 = vmatprep.subr.bf16.mxu0 0
      %1065 = vmatpush1.bf16.msra.mxu0 0
      %1066 = vmatprep.subr.bf16.mxu0 %v1047
      %1067 = vmatpush1.bf16.msra.mxu0 %v1044
      %1068 = vmatprep.subr.bf16.mxu0 0
      %1069 = vmatpush2.bf16.msra.mxu0 0
      %1070 = vmatprep.subr.bf16.mxu0 0
      %1071 = vmatpush2.bf16.msra.mxu0 0
      %1072 = vmatprep.subr.bf16.mxu0 0
      %1073 = vmatpush2.bf16.msra.mxu0 0
      %1074 = vmatprep.subr.bf16.mxu0 0
      %1075 = vmatpush2.bf16.msra.mxu0 0
      %1076 = vmatprep.subr.bf16.mxu0 0
      %1077 = vmatpush2.bf16.msra.mxu0 0
      %1078 = vmatprep.subr.bf16.mxu0 0
      %1079 = vmatpush2.bf16.msra.mxu0 0
      %1080 = vmatprep.subr.bf16.mxu0 0
      %1081 = vmatpush2.bf16.msra.mxu0 0
      %1082 = vmatprep.subr.bf16.mxu0 0
      %1083 = vmatpush2.bf16.msra.mxu0 0
      %1084 = vmatprep.mubr.bf16.mxu0 0
      %1085 = vmatmul.mubr.bf16.gmra.mxu0 %v1041
      %v1086 = vpop.f32.mrf.mxu0
      %v1087 = vadd.f32 0.0, %v1086
      %v1088 = vpop.f32.mrf.mxu0
      %v1089 = vadd.f32 0.0, %v1088
      %v1090 = vpop.f32.mrf.mxu0
      %v1091 = vpop.f32.mrf.mxu0
      %1092 = vdwg.mxu0
      %1093 = vmatprep.subr.bf16.mxu0 0
      %1094 = vmatpush1.bf16.msra.mxu0 0
      %1095 = vmatprep.subr.bf16.mxu0 0
      %1096 = vmatpush1.bf16.msra.mxu0 0
      %1097 = vmatprep.subr.bf16.mxu0 0
      %1098 = vmatpush1.bf16.msra.mxu0 0
      %1099 = vmatprep.subr.bf16.mxu0 0
      %1100 = vmatpush1.bf16.msra.mxu0 0
      %1101 = vmatprep.subr.bf16.mxu0 0
      %1102 = vmatpush1.bf16.msra.mxu0 0
      %1103 = vmatprep.subr.bf16.mxu0 0
      %1104 = vmatpush1.bf16.msra.mxu0 0
      %1105 = vmatprep.subr.bf16.mxu0 0
      %1106 = vmatpush1.bf16.msra.mxu0 0
      %1107 = vmatprep.subr.bf16.mxu0 0
      %1108 = vmatpush1.bf16.msra.mxu0 %v1050
      %1109 = vmatprep.subr.bf16.mxu0 0
      %1110 = vmatpush2.bf16.msra.mxu0 0
      %1111 = vmatprep.subr.bf16.mxu0 0
      %1112 = vmatpush2.bf16.msra.mxu0 0
      %1113 = vmatprep.subr.bf16.mxu0 0
      %1114 = vmatpush2.bf16.msra.mxu0 0
      %1115 = vmatprep.subr.bf16.mxu0 0
      %1116 = vmatpush2.bf16.msra.mxu0 0
      %1117 = vmatprep.subr.bf16.mxu0 0
      %1118 = vmatpush2.bf16.msra.mxu0 0
      %1119 = vmatprep.subr.bf16.mxu0 0
      %1120 = vmatpush2.bf16.msra.mxu0 0
      %1121 = vmatprep.subr.bf16.mxu0 0
      %1122 = vmatpush2.bf16.msra.mxu0 0
      %1123 = vmatprep.subr.bf16.mxu0 0
      %1124 = vmatpush2.bf16.msra.mxu0 0
      %1125 = vmatprep.mubr.bf16.mxu0 0
      %1126 = vmatmul.mubr.bf16.gmra.mxu0 %v1041
      %v1127 = vpop.f32.mrf.mxu0
      %v1128 = vadd.f32 0.0, %v1127
      %v1129 = vpop.f32.mrf.mxu0
      %v1130 = vpop.f32.mrf.mxu0
      %v1131 = vpop.f32.mrf.mxu0
      %1132 = vdwg.mxu0
      %v1133 = vld [vmem:[#allocation4] sm:$0xff]
      %v1134 = vld [vmem:[#allocation4 + $0x8] sm:$0xff]
      %v1135 = vld [vmem:[#allocation4 + $0x10] sm:$0xff]
      %v1136 = vadd.f32 %v1133, %v1087
      %v1137 = vadd.f32 %v1134, %v1089
      %v1138 = vadd.f32 %v1135, %v1128
      %1139 = vst [vmem:[#allocation4] sm:$0xff] %v1136
      %1140 = vst [vmem:[#allocation4 + $0x8] sm:$0xff] %v1137
      %1141 = vst.msk [vmem:[#allocation4 + $0x10] sm:$0xff] %vm354, %v1138
      %v1142 = vld [vmem:[%s217] sm:$0x3f]
      %s1143 = scalar_lea.vmem %s221, 28
      %v1144 = vld [vmem:[%s1143] sm:$0xf]
      %v1146 = vcombine.high %v1142, %v1142
      %v1148 = vunpack.c.l.s4 1983009808
      %v1149 = vunpack.c.0.s8 %v1148
      %v1150 = vlaneseq
      %v1151 = vshrl.u32 %v1150, 7
      %v1152 = vsub.s32 %v1149, %v1151
      %v1153 = vrot.slane %v1142, %v1152
      %v1155 = vunpack.c.l.s4 1983009808
      %v1156 = vunpack.c.0.s8 %v1155
      %v1157 = vlaneseq
      %v1158 = vshrl.u32 %v1157, 7
      %v1159 = vsub.s32 %v1156, %v1158
      %v1160 = vrot.slane %v1146, %v1159
      %v1161 = vcombine.high %v1153, %v1153
      %1162 = vrot.lane.b32.xlu0 %v1153, 91
      %v1163 = vpop.permute.xlu0 %1162
      %1164 = vrot.lane.b32.xlu0 %v1161, 91
      %v1165 = vpop.permute.xlu0 %1164
      %1166 = vrot.lane.b32.xlu0 %v1160, 91
      %v1167 = vpop.permute.xlu0 %1166
      %vm1168 = vcmask 744448
      %v1169 = vsel %vm1168, %v1163, %v1165
      %v1170 = vsel %vm1168, %v1165, %v1167
      %v1172 = vsel %vm257, %v1144, 0
      %v1175 = vsel %vm261, %v1169, 0
      %v1178 = vsel %vm261, %v1170, 0
      %v1181 = vsel %vm261, %v1167, 0
      %1183 = vmatprep.subr.bf16.mxu0 0
      %1184 = vmatpush1.bf16.msra.mxu0 0
      %1185 = vmatprep.subr.bf16.mxu0 0
      %1186 = vmatpush1.bf16.msra.mxu0 0
      %1187 = vmatprep.subr.bf16.mxu0 0
      %1188 = vmatpush1.bf16.msra.mxu0 0
      %1189 = vmatprep.subr.bf16.mxu0 0
      %1190 = vmatpush1.bf16.msra.mxu0 0
      %1191 = vmatprep.subr.bf16.mxu0 0
      %1192 = vmatpush1.bf16.msra.mxu0 0
      %1193 = vmatprep.subr.bf16.mxu0 0
      %1194 = vmatpush1.bf16.msra.mxu0 0
      %1195 = vmatprep.subr.bf16.mxu0 0
      %1196 = vmatpush1.bf16.msra.mxu0 0
      %1197 = vmatprep.subr.bf16.mxu0 %v1178
      %1198 = vmatpush1.bf16.msra.mxu0 %v1175
      %1199 = vmatprep.subr.bf16.mxu0 0
      %1200 = vmatpush2.bf16.msra.mxu0 0
      %1201 = vmatprep.subr.bf16.mxu0 0
      %1202 = vmatpush2.bf16.msra.mxu0 0
      %1203 = vmatprep.subr.bf16.mxu0 0
      %1204 = vmatpush2.bf16.msra.mxu0 0
      %1205 = vmatprep.subr.bf16.mxu0 0
      %1206 = vmatpush2.bf16.msra.mxu0 0
      %1207 = vmatprep.subr.bf16.mxu0 0
      %1208 = vmatpush2.bf16.msra.mxu0 0
      %1209 = vmatprep.subr.bf16.mxu0 0
      %1210 = vmatpush2.bf16.msra.mxu0 0
      %1211 = vmatprep.subr.bf16.mxu0 0
      %1212 = vmatpush2.bf16.msra.mxu0 0
      %1213 = vmatprep.subr.bf16.mxu0 0
      %1214 = vmatpush2.bf16.msra.mxu0 0
      %1215 = vmatprep.mubr.bf16.mxu0 0
      %1216 = vmatmul.mubr.bf16.gmra.mxu0 %v1172
      %v1217 = vpop.f32.mrf.mxu0
      %v1218 = vadd.f32 0.0, %v1217
      %v1219 = vpop.f32.mrf.mxu0
      %v1220 = vadd.f32 0.0, %v1219
      %v1221 = vpop.f32.mrf.mxu0
      %v1222 = vpop.f32.mrf.mxu0
      %1223 = vdwg.mxu0
      %1224 = vmatprep.subr.bf16.mxu0 0
      %1225 = vmatpush1.bf16.msra.mxu0 0
      %1226 = vmatprep.subr.bf16.mxu0 0
      %1227 = vmatpush1.bf16.msra.mxu0 0
      %1228 = vmatprep.subr.bf16.mxu0 0
      %1229 = vmatpush1.bf16.msra.mxu0 0
      %1230 = vmatprep.subr.bf16.mxu0 0
      %1231 = vmatpush1.bf16.msra.mxu0 0
      %1232 = vmatprep.subr.bf16.mxu0 0
      %1233 = vmatpush1.bf16.msra.mxu0 0
      %1234 = vmatprep.subr.bf16.mxu0 0
      %1235 = vmatpush1.bf16.msra.mxu0 0
      %1236 = vmatprep.subr.bf16.mxu0 0
      %1237 = vmatpush1.bf16.msra.mxu0 0
      %1238 = vmatprep.subr.bf16.mxu0 0
      %1239 = vmatpush1.bf16.msra.mxu0 %v1181
      %1240 = vmatprep.subr.bf16.mxu0 0
      %1241 = vmatpush2.bf16.msra.mxu0 0
      %1242 = vmatprep.subr.bf16.mxu0 0
      %1243 = vmatpush2.bf16.msra.mxu0 0
      %1244 = vmatprep.subr.bf16.mxu0 0
      %1245 = vmatpush2.bf16.msra.mxu0 0
      %1246 = vmatprep.subr.bf16.mxu0 0
      %1247 = vmatpush2.bf16.msra.mxu0 0
      %1248 = vmatprep.subr.bf16.mxu0 0
      %1249 = vmatpush2.bf16.msra.mxu0 0
      %1250 = vmatprep.subr.bf16.mxu0 0
      %1251 = vmatpush2.bf16.msra.mxu0 0
      %1252 = vmatprep.subr.bf16.mxu0 0
      %1253 = vmatpush2.bf16.msra.mxu0 0
      %1254 = vmatprep.subr.bf16.mxu0 0
      %1255 = vmatpush2.bf16.msra.mxu0 0
      %1256 = vmatprep.mubr.bf16.mxu0 0
      %1257 = vmatmul.mubr.bf16.gmra.mxu0 %v1172
      %v1258 = vpop.f32.mrf.mxu0
      %v1259 = vadd.f32 0.0, %v1258
      %v1260 = vpop.f32.mrf.mxu0
      %v1261 = vpop.f32.mrf.mxu0
      %v1262 = vpop.f32.mrf.mxu0
      %1263 = vdwg.mxu0
      %v1264 = vld [vmem:[#allocation4] sm:$0xff]
      %v1265 = vld [vmem:[#allocation4 + $0x8] sm:$0xff]
      %v1266 = vld [vmem:[#allocation4 + $0x10] sm:$0xff]
      %v1267 = vadd.f32 %v1264, %v1218
      %v1268 = vadd.f32 %v1265, %v1220
      %v1269 = vadd.f32 %v1266, %v1259
      %1270 = vst [vmem:[#allocation4] sm:$0xff] %v1267
      %1271 = vst [vmem:[#allocation4 + $0x8] sm:$0xff] %v1268
      %1272 = vst.msk [vmem:[#allocation4 + $0x10] sm:$0xff] %vm354, %v1269
      %v1273 = vld [vmem:[%s217] sm:$0x3f]
      %s1274 = scalar_lea.vmem %s221, 32
      %v1275 = vld [vmem:[%s1274] sm:$0xf]
      %v1277 = vcombine.high %v1273, %v1273
      %v1279 = vunpack.c.l.s4 1983009808
      %v1280 = vunpack.c.0.s8 %v1279
      %v1281 = vlaneseq
      %v1282 = vshrl.u32 %v1281, 7
      %v1283 = vsub.s32 %v1280, %v1282
      %v1284 = vrot.slane %v1273, %v1283
      %v1286 = vunpack.c.l.s4 1983009808
      %v1287 = vunpack.c.0.s8 %v1286
      %v1288 = vlaneseq
      %v1289 = vshrl.u32 %v1288, 7
      %v1290 = vsub.s32 %v1287, %v1289
      %v1291 = vrot.slane %v1277, %v1290
      %v1292 = vcombine.high %v1284, %v1284
      %1293 = vrot.lane.b32.xlu0 %v1284, 90
      %v1294 = vpop.permute.xlu0 %1293
      %1295 = vrot.lane.b32.xlu0 %v1292, 90
      %v1296 = vpop.permute.xlu0 %1295
      %1297 = vrot.lane.b32.xlu0 %v1291, 90
      %v1298 = vpop.permute.xlu0 %1297
      %vm1299 = vcmask 736256
      %v1300 = vsel %vm1299, %v1294, %v1296
      %v1301 = vsel %vm1299, %v1296, %v1298
      %v1303 = vsel %vm257, %v1275, 0
      %v1306 = vsel %vm261, %v1300, 0
      %v1309 = vsel %vm261, %v1301, 0
      %v1312 = vsel %vm261, %v1298, 0
      %1314 = vmatprep.subr.bf16.mxu0 0
      %1315 = vmatpush1.bf16.msra.mxu0 0
      %1316 = vmatprep.subr.bf16.mxu0 0
      %1317 = vmatpush1.bf16.msra.mxu0 0
      %1318 = vmatprep.subr.bf16.mxu0 0
      %1319 = vmatpush1.bf16.msra.mxu0 0
      %1320 = vmatprep.subr.bf16.mxu0 0
      %1321 = vmatpush1.bf16.msra.mxu0 0
      %1322 = vmatprep.subr.bf16.mxu0 0
      %1323 = vmatpush1.bf16.msra.mxu0 0
      %1324 = vmatprep.subr.bf16.mxu0 0
      %1325 = vmatpush1.bf16.msra.mxu0 0
      %1326 = vmatprep.subr.bf16.mxu0 0
      %1327 = vmatpush1.bf16.msra.mxu0 0
      %1328 = vmatprep.subr.bf16.mxu0 %v1309
      %1329 = vmatpush1.bf16.msra.mxu0 %v1306
      %1330 = vmatprep.subr.bf16.mxu0 0
      %1331 = vmatpush2.bf16.msra.mxu0 0
      %1332 = vmatprep.subr.bf16.mxu0 0
      %1333 = vmatpush2.bf16.msra.mxu0 0
      %1334 = vmatprep.subr.bf16.mxu0 0
      %1335 = vmatpush2.bf16.msra.mxu0 0
      %1336 = vmatprep.subr.bf16.mxu0 0
      %1337 = vmatpush2.bf16.msra.mxu0 0
      %1338 = vmatprep.subr.bf16.mxu0 0
      %1339 = vmatpush2.bf16.msra.mxu0 0
      %1340 = vmatprep.subr.bf16.mxu0 0
      %1341 = vmatpush2.bf16.msra.mxu0 0
      %1342 = vmatprep.subr.bf16.mxu0 0
      %1343 = vmatpush2.bf16.msra.mxu0 0
      %1344 = vmatprep.subr.bf16.mxu0 0
      %1345 = vmatpush2.bf16.msra.mxu0 0
      %1346 = vmatprep.mubr.bf16.mxu0 0
      %1347 = vmatmul.mubr.bf16.gmra.mxu0 %v1303
      %v1348 = vpop.f32.mrf.mxu0
      %v1349 = vadd.f32 0.0, %v1348
      %v1350 = vpop.f32.mrf.mxu0
      %v1351 = vadd.f32 0.0, %v1350
      %v1352 = vpop.f32.mrf.mxu0
      %v1353 = vpop.f32.mrf.mxu0
      %1354 = vdwg.mxu0
      %1355 = vmatprep.subr.bf16.mxu0 0
      %1356 = vmatpush1.bf16.msra.mxu0 0
      %1357 = vmatprep.subr.bf16.mxu0 0
      %1358 = vmatpush1.bf16.msra.mxu0 0
      %1359 = vmatprep.subr.bf16.mxu0 0
      %1360 = vmatpush1.bf16.msra.mxu0 0
      %1361 = vmatprep.subr.bf16.mxu0 0
      %1362 = vmatpush1.bf16.msra.mxu0 0
      %1363 = vmatprep.subr.bf16.mxu0 0
      %1364 = vmatpush1.bf16.msra.mxu0 0
      %1365 = vmatprep.subr.bf16.mxu0 0
      %1366 = vmatpush1.bf16.msra.mxu0 0
      %1367 = vmatprep.subr.bf16.mxu0 0
      %1368 = vmatpush1.bf16.msra.mxu0 0
      %1369 = vmatprep.subr.bf16.mxu0 0
      %1370 = vmatpush1.bf16.msra.mxu0 %v1312
      %1371 = vmatprep.subr.bf16.mxu0 0
      %1372 = vmatpush2.bf16.msra.mxu0 0
      %1373 = vmatprep.subr.bf16.mxu0 0
      %1374 = vmatpush2.bf16.msra.mxu0 0
      %1375 = vmatprep.subr.bf16.mxu0 0
      %1376 = vmatpush2.bf16.msra.mxu0 0
      %1377 = vmatprep.subr.bf16.mxu0 0
      %1378 = vmatpush2.bf16.msra.mxu0 0
      %1379 = vmatprep.subr.bf16.mxu0 0
      %1380 = vmatpush2.bf16.msra.mxu0 0
      %1381 = vmatprep.subr.bf16.mxu0 0
      %1382 = vmatpush2.bf16.msra.mxu0 0
      %1383 = vmatprep.subr.bf16.mxu0 0
      %1384 = vmatpush2.bf16.msra.mxu0 0
      %1385 = vmatprep.subr.bf16.mxu0 0
      %1386 = vmatpush2.bf16.msra.mxu0 0
      %1387 = vmatprep.mubr.bf16.mxu0 0
      %1388 = vmatmul.mubr.bf16.gmra.mxu0 %v1303
      %v1389 = vpop.f32.mrf.mxu0
      %v1390 = vadd.f32 0.0, %v1389
      %v1391 = vpop.f32.mrf.mxu0
      %v1392 = vpop.f32.mrf.mxu0
      %v1393 = vpop.f32.mrf.mxu0
      %1394 = vdwg.mxu0
      %v1395 = vld [vmem:[#allocation4] sm:$0xff]
      %v1396 = vld [vmem:[#allocation4 + $0x8] sm:$0xff]
      %v1397 = vld [vmem:[#allocation4 + $0x10] sm:$0xff]
      %v1398 = vadd.f32 %v1395, %v1349
      %v1399 = vadd.f32 %v1396, %v1351
      %v1400 = vadd.f32 %v1397, %v1390
      %1401 = vst [vmem:[#allocation4] sm:$0xff] %v1398
      %1402 = vst [vmem:[#allocation4 + $0x8] sm:$0xff] %v1399
      %1403 = vst.msk [vmem:[#allocation4 + $0x10] sm:$0xff] %vm354, %v1400
      %v1404 = vld [vmem:[#allocation4] sm:$0xff]
      %v1405 = vld [vmem:[#allocation4 + $0x8] sm:$0xff]
      %v1406 = vld [vmem:[#allocation4 + $0x10] sm:$0xff]
      %v1407 = vld [vmem:[%s2] sm:$0x7]
      %v1408 = vld [vmem:[#allocation2] sm:$0xff]
      %v1410 = vlaneseq
      %v1411 = vshrl.u32 %v1410, 7
      %v1412 = vsub.s32 0, %v1411
      %v1413 = vrot.slane %v1407, %v1412
      %v1414 = vlaneseq
      %v1415 = vshrl.u32 %v1414, 7
      %v1416 = vsub.s32 1, %v1415
      %v1417 = vrot.slane %v1407, %v1416
      %v1418 = vlaneseq
      %v1419 = vshrl.u32 %v1418, 7
      %v1420 = vsub.s32 2, %v1419
      %v1421 = vrot.slane %v1407, %v1420
      %v1425 = vmul.f32 %v1404, %v1413
      %v1426 = vmul.f32 %v1405, %v1417
      %v1427 = vmul.f32 %v1406, %v1421
      %v1428 = vadd.f32 %v1425, %v1426
      %v1429 = vsel %vm354, %v1427, 0.0
      %v1430 = vadd.f32 %v1428, %v1429
      %1431 = vadd.xlane.f32.xlu0 %v1430
      %v1432 = vpop.xlane.xlu0 %1431
      %v1433 = vadd.f32 %v1408, %v1432
      %vm1434 = vcmask 7168
      %1435 = vst.msk [vmem:[#allocation2] sm:$0xff] %vm1434, %v1433
      %s1436 = smul.u32 %s21, 384
      %s1437 = sshra.s32 %s1436, 7
      %s1438 = sand.u32 %s1436, 127
      %s1439 = smul.addr %s1437, 8
      %s1440 = scalar_lea.vmem %s230, %s1439
      %1441 = vst [vmem:[%s1440] sm:$0xff] %v1404
      %1442 = vst [vmem:[%s1440 + $0x8] sm:$0xff] %v1405
      %1443 = vst.msk [vmem:[%s1440 + $0x10] sm:$0xff] %vm354, %v1406
      // Predicated region
      $region37: #{conv_block_forward.1} parent=31 // pred_check
        %p1444 = pneg %p232
      $region38: #{conv_block_forward.1} parent=31 // pred_check_branch
        %1446 = sbr.rel (%p1444) target = $region40
      $region39: #{conv_block_forward.1} parent=31 // pred_region
        %v1447 = vld [vmem:[#allocation2] sm:$0xff]
        %v1448 = vmul.f32 %v1447, 0.00390625
        %1449 = vst.msk [vmem:[#allocation3] sm:$0xff] %vm1434, 0.0
        %v1450 = vld [vmem:[%s230] sm:$0xff]
        %v1451 = vld [vmem:[%s230 + $0x8] sm:$0xff]
        %v1452 = vld [vmem:[%s230 + $0x10] sm:$0xff]
        %1454 = vset.pattern.permute.xlu0 0
        %1455 = vperm.xlu0 %1454, %v1448
        %v1456 = vpop.permute.xlu0 %1455
        %v1458 = vsub.f32 %v1450, %v1456
        %v1459 = vsub.f32 %v1451, %v1456
        %v1460 = vsub.f32 %v1452, %v1456
        %v1461 = vmul.f32 %v1458, %v1413
        %v1462 = vmul.f32 %v1459, %v1417
        %v1463 = vmul.f32 %v1460, %v1421
        %v1464 = vld [vmem:[#allocation3] sm:$0xff]
        %v1465 = vmul.f32 %v1461, %v1461
        %v1466 = vmul.f32 %v1462, %v1462
        %v1467 = vmul.f32 %v1463, %v1463
        %v1468 = vadd.f32 %v1465, %v1466
        %v1469 = vsel %vm354, %v1467, 0.0
        %v1470 = vadd.f32 %v1468, %v1469
        %1471 = vadd.xlane.f32.xlu0 %v1470
        %v1472 = vpop.xlane.xlu0 %1471
        %v1473 = vadd.f32 %v1464, %v1472
        %1474 = vst.msk [vmem:[#allocation3] sm:$0xff] %vm1434, %v1473
        %v1475 = vld [vmem:[#allocation3] sm:$0xff]
        %v1476 = vmul.f32 %v1475, 0.00390625
        %v1477 = vadd.f32 %v1476, 1e-05
        %v1478 = vrsqrt.pop %v1477
        %v1479 = vld [vmem:[%s230] sm:$0xff]
        %v1480 = vld [vmem:[%s230 + $0x8] sm:$0xff]
        %v1481 = vld [vmem:[%s230 + $0x10] sm:$0xff]
        %v1482 = vsub.f32 %v1479, %v1456
        %v1483 = vsub.f32 %v1480, %v1456
        %v1484 = vsub.f32 %v1481, %v1456
        %1486 = vset.pattern.permute.xlu0 0
        %1487 = vperm.xlu0 %1486, %v1478
        %v1488 = vpop.permute.xlu0 %1487
        %v1490 = vmul.f32 %v1482, %v1488
        %v1491 = vmul.f32 %v1483, %v1488
        %v1492 = vmul.f32 %v1484, %v1488
        %v1493 = vxor.u32 %v1490, 2147483648
        %v1494 = vxor.u32 %v1491, 2147483648
        %v1495 = vxor.u32 %v1492, 2147483648
        %v1496 = vmul.f32 %v1493, 1.442695
        %v1497 = vpow.pop %v1496
        %v1498 = vmul.f32 %v1494, 1.442695
        %v1499 = vpow.pop %v1498
        %v1500 = vmul.f32 %v1495, 1.442695
        %v1501 = vpow.pop %v1500
        %v1502 = vadd.f32 %v1497, 1.0
        %v1503 = vadd.f32 %v1499, 1.0
        %v1504 = vadd.f32 %v1501, 1.0
        %v1505 = vrcp.pop %v1502
        %v1506 = vmul.f32 1.0, %v1505
        %v1507 = vrcp.pop %v1503
        %v1508 = vmul.f32 1.0, %v1507
        %v1509 = vrcp.pop %v1504
        %v1510 = vmul.f32 1.0, %v1509
        %v1511 = vmul.f32 %v1490, %v1506
        %v1512 = vmul.f32 %v1491, %v1508
        %v1513 = vmul.f32 %v1492, %v1510
        %1514 = vst [vmem:[%s230] sm:$0xff] %v1511
        %1515 = vst [vmem:[%s230 + $0x8] sm:$0xff] %v1512
        %1516 = vst.msk [vmem:[%s230 + $0x10] sm:$0xff] %vm354, %v1513
      $region40: #{conv_block_forward.1} parent=31 // pred_fallthru
        _
      %p1517 = scmp.lt.s32.totalorder %s19, 1
      %s1518 = scalar_select %p1517, %s19, 1
      %p1519 = scmp.lt.s32.totalorder %s20, 0
      %s1520 = scalar_select %p1519, %s20, 0
      %s1521 = smul.addr %s1520, 3
      %s1522 = smul.addr %s1518, 3
      %s1523 = sadd.s32 %s1521, %s1522
      %s1524 = smul.addr %s1523, 8
      %s1525 = scalar_lea.vmem %s3, %s1524
      // Predicated region
      $region41: #{conv_block_forward.1} parent=31 // pred_check
        %p1526 = pneg %p128
      $region42: #{conv_block_forward.1} parent=31 // pred_check_branch
        %1528 = sbr.rel (%p1526) target = $region44
      $region43: #{conv_block_forward.1} parent=31 // pred_region
        _
      $region44: #{conv_block_forward.1} parent=31 // pred_fallthru
        _
    $region32: #{conv_block_forward.1} parent=5 // pred_fallthru
      _
    %p1529 = scmp.le.s32.totalorder 2, %s9
    // Predicated region
    $region45: #{conv_block_forward.1} parent=5 // pred_check
      %p1530 = pneg %p1529
    $region46: #{conv_block_forward.1} parent=5 // pred_check_branch
      %1532 = sbr.rel (%p1530) target = $region48
    $region47: #{conv_block_forward.1} parent=5 // pred_region
      %s1533 = ssub.s32 %s9, 2
      // Predicated region
      $region49: #{conv_block_forward.1} parent=47 // pred_check
        %p1534 = pneg %p134
      $region50: #{conv_block_forward.1} parent=47 // pred_check_branch
        %1536 = sbr.rel (%p1534) target = $region52
      $region51: #{conv_block_forward.1} parent=47 // pred_region
        %p1537 = scmp.lt.s32.totalorder %s22, 1
        %s1538 = scalar_select %p1537, %s22, 1
        %p1539 = scmp.lt.s32.totalorder %s23, 0
        %s1540 = scalar_select %p1539, %s23, 0
        %s1541 = smul.addr %s1540, 3
        %s1542 = smul.addr %s1538, 3
        %s1543 = sadd.s32 %s1541, %s1542
        %s1544 = smul.addr %s1543, 8
        %s1545 = scalar_lea.vmem %s3, %s1544
      $region52: #{conv_block_forward.1} parent=47 // pred_fallthru
        _
    $region48: #{conv_block_forward.1} parent=5 // pred_fallthru
      _
  $region6: #{conv_block_forward.1} parent=0 // loop_footer
    %s13 = sadd.s32 1, %s9
  $region7: #{conv_block_forward.1} parent=0 // loop_footer_branch
    %8 = sbr.rel target = $region3
  $region8: #{conv_block_forward.1} parent=0 // loop_exit
    _

</llo_original>
